<compile_context>
chip_gen: v5e
topology: v5e:2x2
jax: 0.10.0
libtpu: 0.0.40
codegen_flags: <defaults>
</compile_context>

<pallas_src>
import functools

import jax
import jax.numpy as jnp
from jax.experimental import pallas as pl
from jax.experimental.pallas import tpu as pltpu  # noqa: F401  (hardware backend)


# ----------------------------------------------------------------------------
# The fused kernel
# ----------------------------------------------------------------------------

def _seq2seq_kernel(xj_ref, wenc_in_ref, wenc_hh_ref, benc_ref,
                    fcw_ref, fcb_ref,
                    win_ref, wctx_f_ref, wctx_b_ref, wdec_q_ref, bout_ref,
                    emb_ref, tgt_ref, rep_ref, valid_ref,
                    wih_e_ref, wih_a_ref, whh_d_ref, bd_ref,
                    wo_ref, bo_ref,
                    loss_ref, *, T, B, H):
    """Whole Seq2Seq forward in one kernel.

    xj_ref:    (T*B, 2E)  joint encoder input, row t*B+b = [emb(x[b,t]) | emb(x[b,T-1-t])]
    wenc_in:   (2E, 8H)   joint input weights  (gate cols [i_f,i_b,f_f,f_b,o_f,o_b,g_f,g_b])
    wenc_hh:   (2H, 8H)   block-diagonal recurrent weights (same col order)
    benc:      (1, 8H)
    fcw/fcb:   (2H, H)/(1, H)   encoder bridge fc
    win:       (H, 2H)    Atten.fc_in.weight (PyTorch layout)  -> q = c0 @ win
    wctx_f/b:  (H, H)     Atten.fc_out.weight^T rows for fwd/bwd context halves
    wdec_q:    (H, H)     Atten.fc_out.weight^T rows for the decoder-state part
    bout:      (1, H)
    emb_ref:   (R, E)     padded decoder-input embeddings (row = t*B+b)
    tgt_ref:   (R, 1)     padded int32 targets (pad rows = -1)
    rep_ref:   (R, B)     row-replication matrix (one-hot of row%B)
    valid_ref: (R, 1)     1.0 for real rows, 0.0 for pad rows
    wih_e/a:   (E,4H)/(H,4H)  decoder LSTM W_ih^T split (emb / attention), order [i,f,o,g]
    whh_d/bd:  (H,4H)/(1,4H)  decoder LSTM recurrent weights / bias,          order [i,f,o,g]
    wo/bo:     (H, V)/(1, V)  decoder.out
    loss_ref:  (1, 1)     sum over steps of mean-over-batch cross-entropy
    """
    f32 = jnp.float32

    # ---------------- encoder: joint fwd+bwd LSTM --------------------------
    # Hoisted joint input projection: one (T*B,2E)@(2E,8H) matmul covers both
    # directions and every time step.
    xp = (jnp.dot(xj_ref[...], wenc_in_ref[...], preferred_element_type=f32)
          + benc_ref[...])                                   # (T*B, 8H)
    whh = wenc_hh_ref[...]                                   # (2H, 8H)

    h = jnp.zeros((B, 2 * H), f32)                           # [:, :H]=fwd, [:, H:]=bwd
    c = jnp.zeros((B, 2 * H), f32)
    hs = []
    for t in range(T):                                       # fully unrolled (T static)
        gates = xp[t * B:(t + 1) * B, :] + jnp.dot(h, whh, preferred_element_type=f32)
        sig = jax.nn.sigmoid(gates[:, 0:6 * H])              # [i_f,i_b,f_f,f_b,o_f,o_b]
        g = jnp.tanh(gates[:, 6 * H:8 * H])                  # [g_f, g_b]
        c = sig[:, 2 * H:4 * H] * c + sig[:, 0:2 * H] * g
        h = sig[:, 4 * H:6 * H] * jnp.tanh(c)
        hs.append(h)

    # Bridge fc fused in: one stacked (2B,2H)@(2H,H) matmul for h and c.
    # Final joint state already has the torch cat(h[0],h[1]) layout [fwd|bwd].
    hc = jnp.concatenate([h, c], axis=0)                     # (2B, 2H)
    bridged = jnp.tanh(jnp.dot(hc, fcw_ref[...], preferred_element_type=f32)
                       + fcb_ref[...])                       # (2B, H)
    h0 = bridged[0:B, :]
    c0 = bridged[B:2 * B, :]

    # ---------------- attention (step-invariant; query = c0) ---------------
    q = jnp.dot(c0, win_ref[...], preferred_element_type=f32)     # (B, 2H)
    q_f = q[:, 0:H]
    q_b = q[:, H:2 * H]
    # enc_out[:, t, :H] = hs[t][:, :H] ;  enc_out[:, t, H:] = hs[T-1-t][:, H:]
    cols = []
    for t in range(T):
        cols.append(jnp.sum(hs[t][:, 0:H] * q_f
                            + hs[T - 1 - t][:, H:2 * H] * q_b,
                            axis=1, keepdims=True))          # (B, 1)
    scores = jnp.concatenate(cols, axis=1)                   # (B, T): lane-axis softmax
    scores = scores - jnp.max(scores, axis=1, keepdims=True)
    e = jnp.exp(scores)
    att = e / jnp.sum(e, axis=1, keepdims=True)

    ctx_f = jnp.zeros((B, H), f32)
    ctx_b = jnp.zeros((B, H), f32)
    for t in range(T):
        w_t = att[:, t:t + 1]
        ctx_f = ctx_f + w_t * hs[t][:, 0:H]
        ctx_b = ctx_b + w_t * hs[T - 1 - t][:, H:2 * H]
    att_out = jnp.tanh(jnp.dot(ctx_f, wctx_f_ref[...], preferred_element_type=f32)
                       + jnp.dot(ctx_b, wctx_b_ref[...], preferred_element_type=f32)
                       + jnp.dot(c0, wdec_q_ref[...], preferred_element_type=f32)
                       + bout_ref[...])                      # (B, H)

    # ---------------- decoder: all Td steps as one batched LSTM cell -------
    base = (jnp.dot(att_out, wih_a_ref[...], preferred_element_type=f32)
            + jnp.dot(h0, whh_d_ref[...], preferred_element_type=f32)
            + bd_ref[...])                                   # (B, 4H), step-invariant
    rep = rep_ref[...]                                       # (R, B)
    base_rep = jnp.dot(rep, base, preferred_element_type=f32)   # (R, 4H)
    c0_rep = jnp.dot(rep, c0, preferred_element_type=f32)       # (R, H)

    gates = jnp.dot(emb_ref[...], wih_e_ref[...], preferred_element_type=f32) + base_rep
    sig = jax.nn.sigmoid(gates[:, 0:3 * H])                  # [i, f, o]
    g = jnp.tanh(gates[:, 3 * H:4 * H])
    c1 = sig[:, H:2 * H] * c0_rep + sig[:, 0:H] * g
    h1 = sig[:, 2 * H:3 * H] * jnp.tanh(c1)                  # (R, H)

    # ---------------- output projection + cross-entropy --------------------
    logits = jnp.dot(h1, wo_ref[...], preferred_element_type=f32) + bo_ref[...]  # (R, V)
    m = jnp.max(logits, axis=-1, keepdims=True)
    lse = m + jnp.log(jnp.sum(jnp.exp(logits - m), axis=-1, keepdims=True))
    col = jax.lax.broadcasted_iota(jnp.int32, logits.shape, 1)
    tgt_logit = jnp.sum(jnp.where(col == tgt_ref[...], logits, 0.0),
                        axis=-1, keepdims=True)              # (R, 1)
    per_row = (lse - tgt_logit) * valid_ref[...]             # pad rows masked out
    # sum_t mean_b CE  ==  sum over valid rows / B
    loss_ref[...] = jnp.sum(per_row, axis=0, keepdims=True) * (1.0 / B)


# ----------------------------------------------------------------------------
# Parameter init + packing (deterministic, shapes follow the PyTorch module)
# ----------------------------------------------------------------------------

def _uniform(key, shape, bound):
    return jax.random.uniform(key, shape, jnp.float32, -bound, bound)


def _lstm_raw(key, in_size, H):
    """PyTorch-layout LSTM params: W_ih (4H,in), W_hh (4H,H), b = b_ih+b_hh (4H,)."""
    k1, k2, k3, k4 = jax.random.split(key, 4)
    bound = 1.0 / (H ** 0.5)
    w_ih = _uniform(k1, (4 * H, in_size), bound)
    w_hh = _uniform(k2, (4 * H, H), bound)
    b = _uniform(k3, (4 * H,), bound) + _uniform(k4, (4 * H,), bound)
    return w_ih, w_hh, b


def _linear_raw(key, in_f, out_f):
    k1, k2 = jax.random.split(key)
    bound = 1.0 / (in_f ** 0.5)
    return _uniform(k1, (out_f, in_f), bound), _uniform(k2, (out_f,), bound)


def _gate_cols(w_t, H):
    """Gate column blocks of a transposed (in,4H) LSTM weight, PyTorch order i,f,g,o."""
    return w_t[:, 0:H], w_t[:, H:2 * H], w_t[:, 2 * H:3 * H], w_t[:, 3 * H:4 * H]


def _reorder_ifog(w_t, H):
    """Permute transposed LSTM weight columns from [i,f,g,o] to [i,f,o,g]."""
    i, f, g, o = _gate_cols(w_t, H)
    return jnp.concatenate([i, f, o, g], axis=1)


def _pack_bi_encoder(fwd, bwd, E, H):
    """Pack both encoder directions into joint block weights.

    Joint gate column order [i_f,i_b,f_f,f_b,o_f,o_b,g_f,g_b]:
      one sigmoid over the first 6H cols, one tanh over the last 2H, and the
      joint (B,2H) state updates elementwise per direction half.
    """
    (wih_f, whh_f, b_f), (wih_b, whh_b, b_b) = fwd, bwd
    i_f, f_f, g_f, o_f = _gate_cols(wih_f.T, H)
    i_b, f_b, g_b, o_b = _gate_cols(wih_b.T, H)
    zE = jnp.zeros((E, H), jnp.float32)
    w_in = jnp.concatenate([
        jnp.concatenate([i_f, zE, f_f, zE, o_f, zE, g_f, zE], axis=1),  # rows act on x_t
        jnp.concatenate([zE, i_b, zE, f_b, zE, o_b, zE, g_b], axis=1),  # rows act on x_{T-1-t}
    ], axis=0)                                                          # (2E, 8H)
    hi_f, hf_f, hg_f, ho_f = _gate_cols(whh_f.T, H)
    hi_b, hf_b, hg_b, ho_b = _gate_cols(whh_b.T, H)
    zH = jnp.zeros((H, H), jnp.float32)
    w_hh = jnp.concatenate([
        jnp.concatenate([hi_f, zH, hf_f, zH, ho_f, zH, hg_f, zH], axis=1),
        jnp.concatenate([zH, hi_b, zH, hf_b, zH, ho_b, zH, hg_b], axis=1),
    ], axis=0)                                                          # (2H, 8H)
    b = jnp.concatenate([b_f[0:H], b_b[0:H], b_f[H:2 * H], b_b[H:2 * H],
                         b_f[3 * H:4 * H], b_b[3 * H:4 * H],
                         b_f[2 * H:3 * H], b_b[2 * H:3 * H]])[None, :]  # (1, 8H)
    return w_in, w_hh, b


def init_params(key, vocab, E, H):
    ks = jax.random.split(key, 10)
    p = {}

    # Encoder
    p['enc_emb'] = jax.random.normal(ks[0], (vocab, E), jnp.float32)
    fwd = _lstm_raw(ks[1], E, H)
    bwd = _lstm_raw(ks[2], E, H)
    p['enc_w_in'], p['enc_w_hh'], p['enc_b'] = _pack_bi_encoder(fwd, bwd, E, H)
    fc_w, fc_b = _linear_raw(ks[3], 2 * H, H)
    p['enc_fc_wt'], p['enc_fc_b'] = fc_w.T, fc_b[None, :]

    # Decoder
    p['dec_emb'] = jax.random.normal(ks[4], (vocab, E), jnp.float32)
    # Atten.fc_in (no bias): kept in PyTorch (out=H, in=2H) layout so the kernel
    # projects the query once (q = c0 @ W_in) instead of projecting every enc position.
    p['att_win'] = _uniform(ks[5], (H, 2 * H), 1.0 / ((2 * H) ** 0.5))
    w_out, b_out = _linear_raw(ks[6], 3 * H, H)               # Atten.fc_out
    wout_t = w_out.T                                          # (3H, H)
    p['att_wctx_f'] = wout_t[0:H, :]                          # fwd-context rows
    p['att_wctx_b'] = wout_t[H:2 * H, :]                      # bwd-context rows
    p['att_wdec'] = wout_t[2 * H:3 * H, :]                    # decoder-state rows
    p['att_bout'] = b_out[None, :]
    wih_d, whh_d, b_d = _lstm_raw(ks[7], E + H, H)            # decoder LSTM
    wih_dt = wih_d.T
    p['dec_wih_emb'] = _reorder_ifog(wih_dt[0:E, :], H)       # (E, 4H) [i,f,o,g]
    p['dec_wih_att'] = _reorder_ifog(wih_dt[E:E + H, :], H)   # (H, 4H)
    p['dec_whh'] = _reorder_ifog(whh_d.T, H)                  # (H, 4H)
    p['dec_b'] = jnp.concatenate([b_d[0:H], b_d[H:2 * H],
                                  b_d[3 * H:4 * H], b_d[2 * H:3 * H]])[None, :]
    w_o, b_o = _linear_raw(ks[8], H, vocab)                   # decoder.out
    p['dec_out_wt'], p['dec_out_b'] = w_o.T, b_o[None, :]
    # TODO(synk): `self.classifier` and the summary()/BOS/PAD/EOS path exist in the
    # reference but are unused by forward(); not implemented.
    return p


# ----------------------------------------------------------------------------
# Model forward (JAX glue around the single fused Pallas kernel)
# ----------------------------------------------------------------------------

def seq2seq_forward(params, x, y, key):
    B, T = x.shape
    E = params['enc_emb'].shape[1]
    H = params['enc_fc_b'].shape[1]

    # --- encoder glue: embedding gather + joint [x_t | x_{T-1-t}] layout -----
    emb = params['enc_emb'][x]                               # (B, T, E) gather (glue)
    emb_tm = jnp.transpose(emb, (1, 0, 2))                   # (T, B, E) time-major
    x_joint = jnp.concatenate([emb_tm, emb_tm[::-1]], axis=-1).reshape(T * B, 2 * E)

    # --- decoder glue: scheduled-sampling token munging + embedding gather ---
    dec_inp = y[:, :-1]                                      # (B, Td)
    dec_tgt = y[:, 1:]
    Td = dec_inp.shape[1]
    # Reference quirk: w.p. 0.9 replace the token with argmax-over-batch of the
    # original input tokens (a batch index used as a token id). dec_hidden is
    # never threaded between steps, so all steps are independent.
    mask = jax.random.bernoulli(key, 0.9, dec_inp.shape)
    replaced = jnp.argmax(dec_inp, axis=0).astype(dec_inp.dtype)   # (Td,)
    tokens = jnp.where(mask, replaced[None, :], dec_inp)
    emb_d = params['dec_emb'][tokens]                        # (B, Td, E) gather (glue)
    emb_flat = jnp.transpose(emb_d, (1, 0, 2)).reshape(Td * B, E)   # step-major rows
    tgt_flat = jnp.transpose(dec_tgt, (1, 0)).reshape(Td * B, 1).astype(jnp.int32)

    # Pad decoder rows to a sublane multiple so the in-kernel math is dense.
    n_valid = Td * B
    R = ((n_valid + 7) // 8) * 8
    pad = R - n_valid
    emb_pad = jnp.pad(emb_flat, ((0, pad), (0, 0)))
    tgt_pad = jnp.pad(tgt_flat, ((0, pad), (0, 0)), constant_values=-1)
    rep = jax.nn.one_hot(jnp.arange(R) % B, B, dtype=jnp.float32)        # (R, B)
    valid = (jnp.arange(R) < n_valid).astype(jnp.float32)[:, None]       # (R, 1)

    kern = functools.partial(_seq2seq_kernel, T=T, B=B, H=H)
    loss = pl.pallas_call(
        kern,
        out_shape=jax.ShapeDtypeStruct((1, 1), jnp.float32),
    )(x_joint,
      params['enc_w_in'], params['enc_w_hh'], params['enc_b'],
      params['enc_fc_wt'], params['enc_fc_b'],
      params['att_win'], params['att_wctx_f'], params['att_wctx_b'],
      params['att_wdec'], params['att_bout'],
      emb_pad, tgt_pad, rep, valid,
      params['dec_wih_emb'], params['dec_wih_att'], params['dec_whh'], params['dec_b'],
      params['dec_out_wt'], params['dec_out_b'])
    return loss[0, 0]


# ----------------------------------------------------------------------------
# Driver
# ----------------------------------------------------------------------------

if __name__ == "__main__":
    B, T_SRC, T_TGT = 2, 8, 6
    E, H, V = 32, 32, 128

    root = jax.random.PRNGKey(0)
    k_param, k_x, k_y, k_ss = jax.random.split(root, 4)

    params = init_params(k_param, V, E, H)
    x = jax.random.randint(k_x, (B, T_SRC), 0, V, dtype=jnp.int32)
    y = jax.random.randint(k_y, (B, T_TGT), 0, V, dtype=jnp.int32)

    fwd = jax.jit(seq2seq_forward)
    loss = jax.block_until_ready(fwd(params, x, y, k_ss))
    assert jnp.isfinite(loss)
    print("KERNEL_OK")
</pallas_src>

<mosaic_0001>
module attributes {stable_mosaic.version = 11 : i64} {
  func.func @_seq2seq_kernel(%arg0: memref<16x64xf32, #tpu.memory_space<vmem>>, %arg1: memref<64x256xf32, #tpu.memory_space<vmem>>, %arg2: memref<64x256xf32, #tpu.memory_space<vmem>>, %arg3: memref<1x256xf32, #tpu.memory_space<vmem>>, %arg4: memref<64x32xf32, #tpu.memory_space<vmem>>, %arg5: memref<1x32xf32, #tpu.memory_space<vmem>>, %arg6: memref<32x64xf32, #tpu.memory_space<vmem>>, %arg7: memref<32x32xf32, #tpu.memory_space<vmem>>, %arg8: memref<32x32xf32, #tpu.memory_space<vmem>>, %arg9: memref<32x32xf32, #tpu.memory_space<vmem>>, %arg10: memref<1x32xf32, #tpu.memory_space<vmem>>, %arg11: memref<16x32xf32, #tpu.memory_space<vmem>>, %arg12: memref<16x1xi32, #tpu.memory_space<vmem>>, %arg13: memref<16x2xf32, #tpu.memory_space<vmem>>, %arg14: memref<16x1xf32, #tpu.memory_space<vmem>>, %arg15: memref<32x128xf32, #tpu.memory_space<vmem>>, %arg16: memref<32x128xf32, #tpu.memory_space<vmem>>, %arg17: memref<32x128xf32, #tpu.memory_space<vmem>>, %arg18: memref<1x128xf32, #tpu.memory_space<vmem>>, %arg19: memref<32x128xf32, #tpu.memory_space<vmem>>, %arg20: memref<1x128xf32, #tpu.memory_space<vmem>>, %arg21: memref<1x1xf32, #tpu.memory_space<vmem>>) attributes {dimension_semantics = [], scalar_prefetch = 0 : i64, scratch_operands = 0 : i64, tpu.core_type = #tpu.core_type<tc>} {
    %c0 = arith.constant 0 : index
    %c0_0 = arith.constant 0 : index
    %0 = vector.load %arg0[%c0, %c0_0] : memref<16x64xf32, #tpu.memory_space<vmem>>, vector<16x64xf32>
    %c0_1 = arith.constant 0 : index
    %c0_2 = arith.constant 0 : index
    %1 = vector.load %arg1[%c0_1, %c0_2] : memref<64x256xf32, #tpu.memory_space<vmem>>, vector<64x256xf32>
    %cst = arith.constant dense<0.000000e+00> : vector<16x256xf32>
    %2 = tpu.matmul %0, %1, %cst {dimension_numbers = #tpu.dot_dimension_numbers<[1], [0], [0], [1], [0, 0, 1, 1], [], []>} : vector<16x64xf32>, vector<64x256xf32>, vector<16x256xf32> -> vector<16x256xf32>
    %c0_3 = arith.constant 0 : index
    %c0_4 = arith.constant 0 : index
    %3 = vector.load %arg3[%c0_3, %c0_4] : memref<1x256xf32, #tpu.memory_space<vmem>>, vector<1x256xf32>
    %4 = vector.broadcast %3 : vector<1x256xf32> to vector<16x256xf32>
    %5 = arith.addf %2, %4 : vector<16x256xf32>
    %c0_5 = arith.constant 0 : index
    %c0_6 = arith.constant 0 : index
    %6 = vector.load %arg2[%c0_5, %c0_6] : memref<64x256xf32, #tpu.memory_space<vmem>>, vector<64x256xf32>
    %cst_7 = arith.constant 0.000000e+00 : f32
    %7 = vector.broadcast %cst_7 : f32 to vector<2x64xf32>
    %cst_8 = arith.constant 0.000000e+00 : f32
    %8 = vector.broadcast %cst_8 : f32 to vector<2x64xf32>
    %9 = vector.extract_strided_slice %5 {offsets = [0, 0], sizes = [2, 256], strides = [1, 1]} : vector<16x256xf32> to vector<2x256xf32>
    %cst_9 = arith.constant dense<0.000000e+00> : vector<2x256xf32>
    %10 = tpu.matmul %7, %6, %cst_9 {dimension_numbers = #tpu.dot_dimension_numbers<[1], [0], [0], [1], [0, 0, 1, 1], [], []>} : vector<2x64xf32>, vector<64x256xf32>, vector<2x256xf32> -> vector<2x256xf32>
    %11 = arith.addf %9, %10 : vector<2x256xf32>
    %12 = vector.extract_strided_slice %11 {offsets = [0, 0], sizes = [2, 192], strides = [1, 1]} : vector<2x256xf32> to vector<2x192xf32>
    %13 = arith.negf %12 : vector<2x192xf32>
    %14 = math.exp %13 : vector<2x192xf32>
    %cst_10 = arith.constant 1.000000e+00 : f32
    %15 = vector.broadcast %cst_10 : f32 to vector<2x192xf32>
    %16 = arith.addf %15, %14 : vector<2x192xf32>
    %17 = arith.divf %15, %16 : vector<2x192xf32>
    %18 = vector.extract_strided_slice %11 {offsets = [0, 192], sizes = [2, 64], strides = [1, 1]} : vector<2x256xf32> to vector<2x64xf32>
    %19 = math.tanh %18 : vector<2x64xf32>
    %20 = vector.extract_strided_slice %17 {offsets = [0, 64], sizes = [2, 64], strides = [1, 1]} : vector<2x192xf32> to vector<2x64xf32>
    %21 = arith.mulf %20, %8 : vector<2x64xf32>
    %22 = vector.extract_strided_slice %17 {offsets = [0, 0], sizes = [2, 64], strides = [1, 1]} : vector<2x192xf32> to vector<2x64xf32>
    %23 = arith.mulf %22, %19 : vector<2x64xf32>
    %24 = arith.addf %21, %23 : vector<2x64xf32>
    %25 = vector.extract_strided_slice %17 {offsets = [0, 128], sizes = [2, 64], strides = [1, 1]} : vector<2x192xf32> to vector<2x64xf32>
    %26 = math.tanh %24 : vector<2x64xf32>
    %27 = arith.mulf %25, %26 : vector<2x64xf32>
    %28 = vector.extract_strided_slice %5 {offsets = [2, 0], sizes = [2, 256], strides = [1, 1]} : vector<16x256xf32> to vector<2x256xf32>
    %cst_11 = arith.constant dense<0.000000e+00> : vector<2x256xf32>
    %29 = tpu.matmul %27, %6, %cst_11 {dimension_numbers = #tpu.dot_dimension_numbers<[1], [0], [0], [1], [0, 0, 1, 1], [], []>} : vector<2x64xf32>, vector<64x256xf32>, vector<2x256xf32> -> vector<2x256xf32>
    %30 = arith.addf %28, %29 : vector<2x256xf32>
    %31 = vector.extract_strided_slice %30 {offsets = [0, 0], sizes = [2, 192], strides = [1, 1]} : vector<2x256xf32> to vector<2x192xf32>
    %32 = arith.negf %31 : vector<2x192xf32>
    %33 = math.exp %32 : vector<2x192xf32>
    %cst_12 = arith.constant 1.000000e+00 : f32
    %34 = vector.broadcast %cst_12 : f32 to vector<2x192xf32>
    %35 = arith.addf %34, %33 : vector<2x192xf32>
    %36 = arith.divf %34, %35 : vector<2x192xf32>
    %37 = vector.extract_strided_slice %30 {offsets = [0, 192], sizes = [2, 64], strides = [1, 1]} : vector<2x256xf32> to vector<2x64xf32>
    %38 = math.tanh %37 : vector<2x64xf32>
    %39 = vector.extract_strided_slice %36 {offsets = [0, 64], sizes = [2, 64], strides = [1, 1]} : vector<2x192xf32> to vector<2x64xf32>
    %40 = arith.mulf %39, %24 : vector<2x64xf32>
    %41 = vector.extract_strided_slice %36 {offsets = [0, 0], sizes = [2, 64], strides = [1, 1]} : vector<2x192xf32> to vector<2x64xf32>
    %42 = arith.mulf %41, %38 : vector<2x64xf32>
    %43 = arith.addf %40, %42 : vector<2x64xf32>
    %44 = vector.extract_strided_slice %36 {offsets = [0, 128], sizes = [2, 64], strides = [1, 1]} : vector<2x192xf32> to vector<2x64xf32>
    %45 = math.tanh %43 : vector<2x64xf32>
    %46 = arith.mulf %44, %45 : vector<2x64xf32>
    %47 = vector.extract_strided_slice %5 {offsets = [4, 0], sizes = [2, 256], strides = [1, 1]} : vector<16x256xf32> to vector<2x256xf32>
    %cst_13 = arith.constant dense<0.000000e+00> : vector<2x256xf32>
    %48 = tpu.matmul %46, %6, %cst_13 {dimension_numbers = #tpu.dot_dimension_numbers<[1], [0], [0], [1], [0, 0, 1, 1], [], []>} : vector<2x64xf32>, vector<64x256xf32>, vector<2x256xf32> -> vector<2x256xf32>
    %49 = arith.addf %47, %48 : vector<2x256xf32>
    %50 = vector.extract_strided_slice %49 {offsets = [0, 0], sizes = [2, 192], strides = [1, 1]} : vector<2x256xf32> to vector<2x192xf32>
    %51 = arith.negf %50 : vector<2x192xf32>
    %52 = math.exp %51 : vector<2x192xf32>
    %cst_14 = arith.constant 1.000000e+00 : f32
    %53 = vector.broadcast %cst_14 : f32 to vector<2x192xf32>
    %54 = arith.addf %53, %52 : vector<2x192xf32>
    %55 = arith.divf %53, %54 : vector<2x192xf32>
    %56 = vector.extract_strided_slice %49 {offsets = [0, 192], sizes = [2, 64], strides = [1, 1]} : vector<2x256xf32> to vector<2x64xf32>
    %57 = math.tanh %56 : vector<2x64xf32>
    %58 = vector.extract_strided_slice %55 {offsets = [0, 64], sizes = [2, 64], strides = [1, 1]} : vector<2x192xf32> to vector<2x64xf32>
    %59 = arith.mulf %58, %43 : vector<2x64xf32>
    %60 = vector.extract_strided_slice %55 {offsets = [0, 0], sizes = [2, 64], strides = [1, 1]} : vector<2x192xf32> to vector<2x64xf32>
    %61 = arith.mulf %60, %57 : vector<2x64xf32>
    %62 = arith.addf %59, %61 : vector<2x64xf32>
    %63 = vector.extract_strided_slice %55 {offsets = [0, 128], sizes = [2, 64], strides = [1, 1]} : vector<2x192xf32> to vector<2x64xf32>
    %64 = math.tanh %62 : vector<2x64xf32>
    %65 = arith.mulf %63, %64 : vector<2x64xf32>
    %66 = vector.extract_strided_slice %5 {offsets = [6, 0], sizes = [2, 256], strides = [1, 1]} : vector<16x256xf32> to vector<2x256xf32>
    %cst_15 = arith.constant dense<0.000000e+00> : vector<2x256xf32>
    %67 = tpu.matmul %65, %6, %cst_15 {dimension_numbers = #tpu.dot_dimension_numbers<[1], [0], [0], [1], [0, 0, 1, 1], [], []>} : vector<2x64xf32>, vector<64x256xf32>, vector<2x256xf32> -> vector<2x256xf32>
    %68 = arith.addf %66, %67 : vector<2x256xf32>
    %69 = vector.extract_strided_slice %68 {offsets = [0, 0], sizes = [2, 192], strides = [1, 1]} : vector<2x256xf32> to vector<2x192xf32>
    %70 = arith.negf %69 : vector<2x192xf32>
    %71 = math.exp %70 : vector<2x192xf32>
    %cst_16 = arith.constant 1.000000e+00 : f32
    %72 = vector.broadcast %cst_16 : f32 to vector<2x192xf32>
    %73 = arith.addf %72, %71 : vector<2x192xf32>
    %74 = arith.divf %72, %73 : vector<2x192xf32>
    %75 = vector.extract_strided_slice %68 {offsets = [0, 192], sizes = [2, 64], strides = [1, 1]} : vector<2x256xf32> to vector<2x64xf32>
    %76 = math.tanh %75 : vector<2x64xf32>
    %77 = vector.extract_strided_slice %74 {offsets = [0, 64], sizes = [2, 64], strides = [1, 1]} : vector<2x192xf32> to vector<2x64xf32>
    %78 = arith.mulf %77, %62 : vector<2x64xf32>
    %79 = vector.extract_strided_slice %74 {offsets = [0, 0], sizes = [2, 64], strides = [1, 1]} : vector<2x192xf32> to vector<2x64xf32>
    %80 = arith.mulf %79, %76 : vector<2x64xf32>
    %81 = arith.addf %78, %80 : vector<2x64xf32>
    %82 = vector.extract_strided_slice %74 {offsets = [0, 128], sizes = [2, 64], strides = [1, 1]} : vector<2x192xf32> to vector<2x64xf32>
    %83 = math.tanh %81 : vector<2x64xf32>
    %84 = arith.mulf %82, %83 : vector<2x64xf32>
    %85 = vector.extract_strided_slice %5 {offsets = [8, 0], sizes = [2, 256], strides = [1, 1]} : vector<16x256xf32> to vector<2x256xf32>
    %cst_17 = arith.constant dense<0.000000e+00> : vector<2x256xf32>
    %86 = tpu.matmul %84, %6, %cst_17 {dimension_numbers = #tpu.dot_dimension_numbers<[1], [0], [0], [1], [0, 0, 1, 1], [], []>} : vector<2x64xf32>, vector<64x256xf32>, vector<2x256xf32> -> vector<2x256xf32>
    %87 = arith.addf %85, %86 : vector<2x256xf32>
    %88 = vector.extract_strided_slice %87 {offsets = [0, 0], sizes = [2, 192], strides = [1, 1]} : vector<2x256xf32> to vector<2x192xf32>
    %89 = arith.negf %88 : vector<2x192xf32>
    %90 = math.exp %89 : vector<2x192xf32>
    %cst_18 = arith.constant 1.000000e+00 : f32
    %91 = vector.broadcast %cst_18 : f32 to vector<2x192xf32>
    %92 = arith.addf %91, %90 : vector<2x192xf32>
    %93 = arith.divf %91, %92 : vector<2x192xf32>
    %94 = vector.extract_strided_slice %87 {offsets = [0, 192], sizes = [2, 64], strides = [1, 1]} : vector<2x256xf32> to vector<2x64xf32>
    %95 = math.tanh %94 : vector<2x64xf32>
    %96 = vector.extract_strided_slice %93 {offsets = [0, 64], sizes = [2, 64], strides = [1, 1]} : vector<2x192xf32> to vector<2x64xf32>
    %97 = arith.mulf %96, %81 : vector<2x64xf32>
    %98 = vector.extract_strided_slice %93 {offsets = [0, 0], sizes = [2, 64], strides = [1, 1]} : vector<2x192xf32> to vector<2x64xf32>
    %99 = arith.mulf %98, %95 : vector<2x64xf32>
    %100 = arith.addf %97, %99 : vector<2x64xf32>
    %101 = vector.extract_strided_slice %93 {offsets = [0, 128], sizes = [2, 64], strides = [1, 1]} : vector<2x192xf32> to vector<2x64xf32>
    %102 = math.tanh %100 : vector<2x64xf32>
    %103 = arith.mulf %101, %102 : vector<2x64xf32>
    %104 = vector.extract_strided_slice %5 {offsets = [10, 0], sizes = [2, 256], strides = [1, 1]} : vector<16x256xf32> to vector<2x256xf32>
    %cst_19 = arith.constant dense<0.000000e+00> : vector<2x256xf32>
    %105 = tpu.matmul %103, %6, %cst_19 {dimension_numbers = #tpu.dot_dimension_numbers<[1], [0], [0], [1], [0, 0, 1, 1], [], []>} : vector<2x64xf32>, vector<64x256xf32>, vector<2x256xf32> -> vector<2x256xf32>
    %106 = arith.addf %104, %105 : vector<2x256xf32>
    %107 = vector.extract_strided_slice %106 {offsets = [0, 0], sizes = [2, 192], strides = [1, 1]} : vector<2x256xf32> to vector<2x192xf32>
    %108 = arith.negf %107 : vector<2x192xf32>
    %109 = math.exp %108 : vector<2x192xf32>
    %cst_20 = arith.constant 1.000000e+00 : f32
    %110 = vector.broadcast %cst_20 : f32 to vector<2x192xf32>
    %111 = arith.addf %110, %109 : vector<2x192xf32>
    %112 = arith.divf %110, %111 : vector<2x192xf32>
    %113 = vector.extract_strided_slice %106 {offsets = [0, 192], sizes = [2, 64], strides = [1, 1]} : vector<2x256xf32> to vector<2x64xf32>
    %114 = math.tanh %113 : vector<2x64xf32>
    %115 = vector.extract_strided_slice %112 {offsets = [0, 64], sizes = [2, 64], strides = [1, 1]} : vector<2x192xf32> to vector<2x64xf32>
    %116 = arith.mulf %115, %100 : vector<2x64xf32>
    %117 = vector.extract_strided_slice %112 {offsets = [0, 0], sizes = [2, 64], strides = [1, 1]} : vector<2x192xf32> to vector<2x64xf32>
    %118 = arith.mulf %117, %114 : vector<2x64xf32>
    %119 = arith.addf %116, %118 : vector<2x64xf32>
    %120 = vector.extract_strided_slice %112 {offsets = [0, 128], sizes = [2, 64], strides = [1, 1]} : vector<2x192xf32> to vector<2x64xf32>
    %121 = math.tanh %119 : vector<2x64xf32>
    %122 = arith.mulf %120, %121 : vector<2x64xf32>
    %123 = vector.extract_strided_slice %5 {offsets = [12, 0], sizes = [2, 256], strides = [1, 1]} : vector<16x256xf32> to vector<2x256xf32>
    %cst_21 = arith.constant dense<0.000000e+00> : vector<2x256xf32>
    %124 = tpu.matmul %122, %6, %cst_21 {dimension_numbers = #tpu.dot_dimension_numbers<[1], [0], [0], [1], [0, 0, 1, 1], [], []>} : vector<2x64xf32>, vector<64x256xf32>, vector<2x256xf32> -> vector<2x256xf32>
    %125 = arith.addf %123, %124 : vector<2x256xf32>
    %126 = vector.extract_strided_slice %125 {offsets = [0, 0], sizes = [2, 192], strides = [1, 1]} : vector<2x256xf32> to vector<2x192xf32>
    %127 = arith.negf %126 : vector<2x192xf32>
    %128 = math.exp %127 : vector<2x192xf32>
    %cst_22 = arith.constant 1.000000e+00 : f32
    %129 = vector.broadcast %cst_22 : f32 to vector<2x192xf32>
    %130 = arith.addf %129, %128 : vector<2x192xf32>
    %131 = arith.divf %129, %130 : vector<2x192xf32>
    %132 = vector.extract_strided_slice %125 {offsets = [0, 192], sizes = [2, 64], strides = [1, 1]} : vector<2x256xf32> to vector<2x64xf32>
    %133 = math.tanh %132 : vector<2x64xf32>
    %134 = vector.extract_strided_slice %131 {offsets = [0, 64], sizes = [2, 64], strides = [1, 1]} : vector<2x192xf32> to vector<2x64xf32>
    %135 = arith.mulf %134, %119 : vector<2x64xf32>
    %136 = vector.extract_strided_slice %131 {offsets = [0, 0], sizes = [2, 64], strides = [1, 1]} : vector<2x192xf32> to vector<2x64xf32>
    %137 = arith.mulf %136, %133 : vector<2x64xf32>
    %138 = arith.addf %135, %137 : vector<2x64xf32>
    %139 = vector.extract_strided_slice %131 {offsets = [0, 128], sizes = [2, 64], strides = [1, 1]} : vector<2x192xf32> to vector<2x64xf32>
    %140 = math.tanh %138 : vector<2x64xf32>
    %141 = arith.mulf %139, %140 : vector<2x64xf32>
    %142 = vector.extract_strided_slice %5 {offsets = [14, 0], sizes = [2, 256], strides = [1, 1]} : vector<16x256xf32> to vector<2x256xf32>
    %cst_23 = arith.constant dense<0.000000e+00> : vector<2x256xf32>
    %143 = tpu.matmul %141, %6, %cst_23 {dimension_numbers = #tpu.dot_dimension_numbers<[1], [0], [0], [1], [0, 0, 1, 1], [], []>} : vector<2x64xf32>, vector<64x256xf32>, vector<2x256xf32> -> vector<2x256xf32>
    %144 = arith.addf %142, %143 : vector<2x256xf32>
    %145 = vector.extract_strided_slice %144 {offsets = [0, 0], sizes = [2, 192], strides = [1, 1]} : vector<2x256xf32> to vector<2x192xf32>
    %146 = arith.negf %145 : vector<2x192xf32>
    %147 = math.exp %146 : vector<2x192xf32>
    %cst_24 = arith.constant 1.000000e+00 : f32
    %148 = vector.broadcast %cst_24 : f32 to vector<2x192xf32>
    %149 = arith.addf %148, %147 : vector<2x192xf32>
    %150 = arith.divf %148, %149 : vector<2x192xf32>
    %151 = vector.extract_strided_slice %144 {offsets = [0, 192], sizes = [2, 64], strides = [1, 1]} : vector<2x256xf32> to vector<2x64xf32>
    %152 = math.tanh %151 : vector<2x64xf32>
    %153 = vector.extract_strided_slice %150 {offsets = [0, 64], sizes = [2, 64], strides = [1, 1]} : vector<2x192xf32> to vector<2x64xf32>
    %154 = arith.mulf %153, %138 : vector<2x64xf32>
    %155 = vector.extract_strided_slice %150 {offsets = [0, 0], sizes = [2, 64], strides = [1, 1]} : vector<2x192xf32> to vector<2x64xf32>
    %156 = arith.mulf %155, %152 : vector<2x64xf32>
    %157 = arith.addf %154, %156 : vector<2x64xf32>
    %158 = vector.extract_strided_slice %150 {offsets = [0, 128], sizes = [2, 64], strides = [1, 1]} : vector<2x192xf32> to vector<2x64xf32>
    %159 = math.tanh %157 : vector<2x64xf32>
    %160 = arith.mulf %158, %159 : vector<2x64xf32>
    %161 = tpu.concatenate %160, %157 in 0 : vector<2x64xf32>, vector<2x64xf32> -> vector<4x64xf32>
    %c0_25 = arith.constant 0 : index
    %c0_26 = arith.constant 0 : index
    %162 = vector.load %arg4[%c0_25, %c0_26] : memref<64x32xf32, #tpu.memory_space<vmem>>, vector<64x32xf32>
    %cst_27 = arith.constant dense<0.000000e+00> : vector<4x32xf32>
    %163 = tpu.matmul %161, %162, %cst_27 {dimension_numbers = #tpu.dot_dimension_numbers<[1], [0], [0], [1], [0, 0, 1, 1], [], []>} : vector<4x64xf32>, vector<64x32xf32>, vector<4x32xf32> -> vector<4x32xf32>
    %c0_28 = arith.constant 0 : index
    %c0_29 = arith.constant 0 : index
    %164 = vector.load %arg5[%c0_28, %c0_29] : memref<1x32xf32, #tpu.memory_space<vmem>>, vector<1x32xf32>
    %165 = vector.broadcast %164 : vector<1x32xf32> to vector<4x32xf32>
    %166 = arith.addf %163, %165 : vector<4x32xf32>
    %167 = math.tanh %166 : vector<4x32xf32>
    %168 = vector.extract_strided_slice %167 {offsets = [0, 0], sizes = [2, 32], strides = [1, 1]} : vector<4x32xf32> to vector<2x32xf32>
    %169 = vector.extract_strided_slice %167 {offsets = [2, 0], sizes = [2, 32], strides = [1, 1]} : vector<4x32xf32> to vector<2x32xf32>
    %c0_30 = arith.constant 0 : index
    %c0_31 = arith.constant 0 : index
    %170 = vector.load %arg6[%c0_30, %c0_31] : memref<32x64xf32, #tpu.memory_space<vmem>>, vector<32x64xf32>
    %cst_32 = arith.constant dense<0.000000e+00> : vector<2x64xf32>
    %171 = tpu.matmul %169, %170, %cst_32 {dimension_numbers = #tpu.dot_dimension_numbers<[1], [0], [0], [1], [0, 0, 1, 1], [], []>} : vector<2x32xf32>, vector<32x64xf32>, vector<2x64xf32> -> vector<2x64xf32>
    %172 = vector.extract_strided_slice %171 {offsets = [0, 0], sizes = [2, 32], strides = [1, 1]} : vector<2x64xf32> to vector<2x32xf32>
    %173 = vector.extract_strided_slice %171 {offsets = [0, 32], sizes = [2, 32], strides = [1, 1]} : vector<2x64xf32> to vector<2x32xf32>
    %174 = vector.extract_strided_slice %27 {offsets = [0, 0], sizes = [2, 32], strides = [1, 1]} : vector<2x64xf32> to vector<2x32xf32>
    %175 = arith.mulf %174, %172 : vector<2x32xf32>
    %176 = vector.extract_strided_slice %160 {offsets = [0, 32], sizes = [2, 32], strides = [1, 1]} : vector<2x64xf32> to vector<2x32xf32>
    %177 = arith.mulf %176, %173 : vector<2x32xf32>
    %178 = arith.addf %175, %177 : vector<2x32xf32>
    %cst_33 = arith.constant dense<0.000000e+00> : vector<2xf32>
    %179 = vector.multi_reduction <add>, %178, %cst_33 [1] : vector<2x32xf32> to vector<2xf32>
    %180 = vector.shape_cast %179 : vector<2xf32> to vector<2x1xf32>
    %181 = vector.extract_strided_slice %46 {offsets = [0, 0], sizes = [2, 32], strides = [1, 1]} : vector<2x64xf32> to vector<2x32xf32>
    %182 = arith.mulf %181, %172 : vector<2x32xf32>
    %183 = vector.extract_strided_slice %141 {offsets = [0, 32], sizes = [2, 32], strides = [1, 1]} : vector<2x64xf32> to vector<2x32xf32>
    %184 = arith.mulf %183, %173 : vector<2x32xf32>
    %185 = arith.addf %182, %184 : vector<2x32xf32>
    %cst_34 = arith.constant dense<0.000000e+00> : vector<2xf32>
    %186 = vector.multi_reduction <add>, %185, %cst_34 [1] : vector<2x32xf32> to vector<2xf32>
    %187 = vector.shape_cast %186 : vector<2xf32> to vector<2x1xf32>
    %188 = vector.extract_strided_slice %65 {offsets = [0, 0], sizes = [2, 32], strides = [1, 1]} : vector<2x64xf32> to vector<2x32xf32>
    %189 = arith.mulf %188, %172 : vector<2x32xf32>
    %190 = vector.extract_strided_slice %122 {offsets = [0, 32], sizes = [2, 32], strides = [1, 1]} : vector<2x64xf32> to vector<2x32xf32>
    %191 = arith.mulf %190, %173 : vector<2x32xf32>
    %192 = arith.addf %189, %191 : vector<2x32xf32>
    %cst_35 = arith.constant dense<0.000000e+00> : vector<2xf32>
    %193 = vector.multi_reduction <add>, %192, %cst_35 [1] : vector<2x32xf32> to vector<2xf32>
    %194 = vector.shape_cast %193 : vector<2xf32> to vector<2x1xf32>
    %195 = vector.extract_strided_slice %84 {offsets = [0, 0], sizes = [2, 32], strides = [1, 1]} : vector<2x64xf32> to vector<2x32xf32>
    %196 = arith.mulf %195, %172 : vector<2x32xf32>
    %197 = vector.extract_strided_slice %103 {offsets = [0, 32], sizes = [2, 32], strides = [1, 1]} : vector<2x64xf32> to vector<2x32xf32>
    %198 = arith.mulf %197, %173 : vector<2x32xf32>
    %199 = arith.addf %196, %198 : vector<2x32xf32>
    %cst_36 = arith.constant dense<0.000000e+00> : vector<2xf32>
    %200 = vector.multi_reduction <add>, %199, %cst_36 [1] : vector<2x32xf32> to vector<2xf32>
    %201 = vector.shape_cast %200 : vector<2xf32> to vector<2x1xf32>
    %202 = vector.extract_strided_slice %103 {offsets = [0, 0], sizes = [2, 32], strides = [1, 1]} : vector<2x64xf32> to vector<2x32xf32>
    %203 = arith.mulf %202, %172 : vector<2x32xf32>
    %204 = vector.extract_strided_slice %84 {offsets = [0, 32], sizes = [2, 32], strides = [1, 1]} : vector<2x64xf32> to vector<2x32xf32>
    %205 = arith.mulf %204, %173 : vector<2x32xf32>
    %206 = arith.addf %203, %205 : vector<2x32xf32>
    %cst_37 = arith.constant dense<0.000000e+00> : vector<2xf32>
    %207 = vector.multi_reduction <add>, %206, %cst_37 [1] : vector<2x32xf32> to vector<2xf32>
    %208 = vector.shape_cast %207 : vector<2xf32> to vector<2x1xf32>
    %209 = vector.extract_strided_slice %122 {offsets = [0, 0], sizes = [2, 32], strides = [1, 1]} : vector<2x64xf32> to vector<2x32xf32>
    %210 = arith.mulf %209, %172 : vector<2x32xf32>
    %211 = vector.extract_strided_slice %65 {offsets = [0, 32], sizes = [2, 32], strides = [1, 1]} : vector<2x64xf32> to vector<2x32xf32>
    %212 = arith.mulf %211, %173 : vector<2x32xf32>
    %213 = arith.addf %210, %212 : vector<2x32xf32>
    %cst_38 = arith.constant dense<0.000000e+00> : vector<2xf32>
    %214 = vector.multi_reduction <add>, %213, %cst_38 [1] : vector<2x32xf32> to vector<2xf32>
    %215 = vector.shape_cast %214 : vector<2xf32> to vector<2x1xf32>
    %216 = vector.extract_strided_slice %141 {offsets = [0, 0], sizes = [2, 32], strides = [1, 1]} : vector<2x64xf32> to vector<2x32xf32>
    %217 = arith.mulf %216, %172 : vector<2x32xf32>
    %218 = vector.extract_strided_slice %46 {offsets = [0, 32], sizes = [2, 32], strides = [1, 1]} : vector<2x64xf32> to vector<2x32xf32>
    %219 = arith.mulf %218, %173 : vector<2x32xf32>
    %220 = arith.addf %217, %219 : vector<2x32xf32>
    %cst_39 = arith.constant dense<0.000000e+00> : vector<2xf32>
    %221 = vector.multi_reduction <add>, %220, %cst_39 [1] : vector<2x32xf32> to vector<2xf32>
    %222 = vector.shape_cast %221 : vector<2xf32> to vector<2x1xf32>
    %223 = vector.extract_strided_slice %160 {offsets = [0, 0], sizes = [2, 32], strides = [1, 1]} : vector<2x64xf32> to vector<2x32xf32>
    %224 = arith.mulf %223, %172 : vector<2x32xf32>
    %225 = vector.extract_strided_slice %27 {offsets = [0, 32], sizes = [2, 32], strides = [1, 1]} : vector<2x64xf32> to vector<2x32xf32>
    %226 = arith.mulf %225, %173 : vector<2x32xf32>
    %227 = arith.addf %224, %226 : vector<2x32xf32>
    %cst_40 = arith.constant dense<0.000000e+00> : vector<2xf32>
    %228 = vector.multi_reduction <add>, %227, %cst_40 [1] : vector<2x32xf32> to vector<2xf32>
    %229 = vector.shape_cast %228 : vector<2xf32> to vector<2x1xf32>
    %230 = tpu.concatenate %180, %187, %194, %201, %208, %215, %222, %229 in 1 : vector<2x1xf32>, vector<2x1xf32>, vector<2x1xf32>, vector<2x1xf32>, vector<2x1xf32>, vector<2x1xf32>, vector<2x1xf32>, vector<2x1xf32> -> vector<2x8xf32>
    %cst_41 = arith.constant dense<0xFF800000> : vector<2xf32>
    %231 = vector.multi_reduction <maximumf>, %230, %cst_41 [1] : vector<2x8xf32> to vector<2xf32>
    %232 = vector.shape_cast %231 : vector<2xf32> to vector<2x1xf32>
    %233 = vector.broadcast %232 : vector<2x1xf32> to vector<2x8xf32>
    %234 = arith.subf %230, %233 : vector<2x8xf32>
    %235 = math.exp %234 : vector<2x8xf32>
    %cst_42 = arith.constant dense<0.000000e+00> : vector<2xf32>
    %236 = vector.multi_reduction <add>, %235, %cst_42 [1] : vector<2x8xf32> to vector<2xf32>
    %237 = vector.shape_cast %236 : vector<2xf32> to vector<2x1xf32>
    %238 = vector.broadcast %237 : vector<2x1xf32> to vector<2x8xf32>
    %239 = arith.divf %235, %238 : vector<2x8xf32>
    %cst_43 = arith.constant 0.000000e+00 : f32
    %240 = vector.broadcast %cst_43 : f32 to vector<2x32xf32>
    %cst_44 = arith.constant 0.000000e+00 : f32
    %241 = vector.broadcast %cst_44 : f32 to vector<2x32xf32>
    %242 = vector.extract_strided_slice %239 {offsets = [0, 0], sizes = [2, 1], strides = [1, 1]} : vector<2x8xf32> to vector<2x1xf32>
    %243 = vector.extract_strided_slice %27 {offsets = [0, 0], sizes = [2, 32], strides = [1, 1]} : vector<2x64xf32> to vector<2x32xf32>
    %244 = vector.broadcast %242 : vector<2x1xf32> to vector<2x32xf32>
    %245 = arith.mulf %244, %243 : vector<2x32xf32>
    %246 = arith.addf %240, %245 : vector<2x32xf32>
    %247 = vector.extract_strided_slice %160 {offsets = [0, 32], sizes = [2, 32], strides = [1, 1]} : vector<2x64xf32> to vector<2x32xf32>
    %248 = vector.broadcast %242 : vector<2x1xf32> to vector<2x32xf32>
    %249 = arith.mulf %248, %247 : vector<2x32xf32>
    %250 = arith.addf %241, %249 : vector<2x32xf32>
    %251 = vector.extract_strided_slice %239 {offsets = [0, 1], sizes = [2, 1], strides = [1, 1]} : vector<2x8xf32> to vector<2x1xf32>
    %252 = vector.extract_strided_slice %46 {offsets = [0, 0], sizes = [2, 32], strides = [1, 1]} : vector<2x64xf32> to vector<2x32xf32>
    %253 = vector.broadcast %251 : vector<2x1xf32> to vector<2x32xf32>
    %254 = arith.mulf %253, %252 : vector<2x32xf32>
    %255 = arith.addf %246, %254 : vector<2x32xf32>
    %256 = vector.extract_strided_slice %141 {offsets = [0, 32], sizes = [2, 32], strides = [1, 1]} : vector<2x64xf32> to vector<2x32xf32>
    %257 = vector.broadcast %251 : vector<2x1xf32> to vector<2x32xf32>
    %258 = arith.mulf %257, %256 : vector<2x32xf32>
    %259 = arith.addf %250, %258 : vector<2x32xf32>
    %260 = vector.extract_strided_slice %239 {offsets = [0, 2], sizes = [2, 1], strides = [1, 1]} : vector<2x8xf32> to vector<2x1xf32>
    %261 = vector.extract_strided_slice %65 {offsets = [0, 0], sizes = [2, 32], strides = [1, 1]} : vector<2x64xf32> to vector<2x32xf32>
    %262 = vector.broadcast %260 : vector<2x1xf32> to vector<2x32xf32>
    %263 = arith.mulf %262, %261 : vector<2x32xf32>
    %264 = arith.addf %255, %263 : vector<2x32xf32>
    %265 = vector.extract_strided_slice %122 {offsets = [0, 32], sizes = [2, 32], strides = [1, 1]} : vector<2x64xf32> to vector<2x32xf32>
    %266 = vector.broadcast %260 : vector<2x1xf32> to vector<2x32xf32>
    %267 = arith.mulf %266, %265 : vector<2x32xf32>
    %268 = arith.addf %259, %267 : vector<2x32xf32>
    %269 = vector.extract_strided_slice %239 {offsets = [0, 3], sizes = [2, 1], strides = [1, 1]} : vector<2x8xf32> to vector<2x1xf32>
    %270 = vector.extract_strided_slice %84 {offsets = [0, 0], sizes = [2, 32], strides = [1, 1]} : vector<2x64xf32> to vector<2x32xf32>
    %271 = vector.broadcast %269 : vector<2x1xf32> to vector<2x32xf32>
    %272 = arith.mulf %271, %270 : vector<2x32xf32>
    %273 = arith.addf %264, %272 : vector<2x32xf32>
    %274 = vector.extract_strided_slice %103 {offsets = [0, 32], sizes = [2, 32], strides = [1, 1]} : vector<2x64xf32> to vector<2x32xf32>
    %275 = vector.broadcast %269 : vector<2x1xf32> to vector<2x32xf32>
    %276 = arith.mulf %275, %274 : vector<2x32xf32>
    %277 = arith.addf %268, %276 : vector<2x32xf32>
    %278 = vector.extract_strided_slice %239 {offsets = [0, 4], sizes = [2, 1], strides = [1, 1]} : vector<2x8xf32> to vector<2x1xf32>
    %279 = vector.extract_strided_slice %103 {offsets = [0, 0], sizes = [2, 32], strides = [1, 1]} : vector<2x64xf32> to vector<2x32xf32>
    %280 = vector.broadcast %278 : vector<2x1xf32> to vector<2x32xf32>
    %281 = arith.mulf %280, %279 : vector<2x32xf32>
    %282 = arith.addf %273, %281 : vector<2x32xf32>
    %283 = vector.extract_strided_slice %84 {offsets = [0, 32], sizes = [2, 32], strides = [1, 1]} : vector<2x64xf32> to vector<2x32xf32>
    %284 = vector.broadcast %278 : vector<2x1xf32> to vector<2x32xf32>
    %285 = arith.mulf %284, %283 : vector<2x32xf32>
    %286 = arith.addf %277, %285 : vector<2x32xf32>
    %287 = vector.extract_strided_slice %239 {offsets = [0, 5], sizes = [2, 1], strides = [1, 1]} : vector<2x8xf32> to vector<2x1xf32>
    %288 = vector.extract_strided_slice %122 {offsets = [0, 0], sizes = [2, 32], strides = [1, 1]} : vector<2x64xf32> to vector<2x32xf32>
    %289 = vector.broadcast %287 : vector<2x1xf32> to vector<2x32xf32>
    %290 = arith.mulf %289, %288 : vector<2x32xf32>
    %291 = arith.addf %282, %290 : vector<2x32xf32>
    %292 = vector.extract_strided_slice %65 {offsets = [0, 32], sizes = [2, 32], strides = [1, 1]} : vector<2x64xf32> to vector<2x32xf32>
    %293 = vector.broadcast %287 : vector<2x1xf32> to vector<2x32xf32>
    %294 = arith.mulf %293, %292 : vector<2x32xf32>
    %295 = arith.addf %286, %294 : vector<2x32xf32>
    %296 = vector.extract_strided_slice %239 {offsets = [0, 6], sizes = [2, 1], strides = [1, 1]} : vector<2x8xf32> to vector<2x1xf32>
    %297 = vector.extract_strided_slice %141 {offsets = [0, 0], sizes = [2, 32], strides = [1, 1]} : vector<2x64xf32> to vector<2x32xf32>
    %298 = vector.broadcast %296 : vector<2x1xf32> to vector<2x32xf32>
    %299 = arith.mulf %298, %297 : vector<2x32xf32>
    %300 = arith.addf %291, %299 : vector<2x32xf32>
    %301 = vector.extract_strided_slice %46 {offsets = [0, 32], sizes = [2, 32], strides = [1, 1]} : vector<2x64xf32> to vector<2x32xf32>
    %302 = vector.broadcast %296 : vector<2x1xf32> to vector<2x32xf32>
    %303 = arith.mulf %302, %301 : vector<2x32xf32>
    %304 = arith.addf %295, %303 : vector<2x32xf32>
    %305 = vector.extract_strided_slice %239 {offsets = [0, 7], sizes = [2, 1], strides = [1, 1]} : vector<2x8xf32> to vector<2x1xf32>
    %306 = vector.extract_strided_slice %160 {offsets = [0, 0], sizes = [2, 32], strides = [1, 1]} : vector<2x64xf32> to vector<2x32xf32>
    %307 = vector.broadcast %305 : vector<2x1xf32> to vector<2x32xf32>
    %308 = arith.mulf %307, %306 : vector<2x32xf32>
    %309 = arith.addf %300, %308 : vector<2x32xf32>
    %310 = vector.extract_strided_slice %27 {offsets = [0, 32], sizes = [2, 32], strides = [1, 1]} : vector<2x64xf32> to vector<2x32xf32>
    %311 = vector.broadcast %305 : vector<2x1xf32> to vector<2x32xf32>
    %312 = arith.mulf %311, %310 : vector<2x32xf32>
    %313 = arith.addf %304, %312 : vector<2x32xf32>
    %c0_45 = arith.constant 0 : index
    %c0_46 = arith.constant 0 : index
    %314 = vector.load %arg7[%c0_45, %c0_46] : memref<32x32xf32, #tpu.memory_space<vmem>>, vector<32x32xf32>
    %cst_47 = arith.constant dense<0.000000e+00> : vector<2x32xf32>
    %315 = tpu.matmul %309, %314, %cst_47 {dimension_numbers = #tpu.dot_dimension_numbers<[1], [0], [0], [1], [0, 0, 1, 1], [], []>} : vector<2x32xf32>, vector<32x32xf32>, vector<2x32xf32> -> vector<2x32xf32>
    %c0_48 = arith.constant 0 : index
    %c0_49 = arith.constant 0 : index
    %316 = vector.load %arg8[%c0_48, %c0_49] : memref<32x32xf32, #tpu.memory_space<vmem>>, vector<32x32xf32>
    %cst_50 = arith.constant dense<0.000000e+00> : vector<2x32xf32>
    %317 = tpu.matmul %313, %316, %cst_50 {dimension_numbers = #tpu.dot_dimension_numbers<[1], [0], [0], [1], [0, 0, 1, 1], [], []>} : vector<2x32xf32>, vector<32x32xf32>, vector<2x32xf32> -> vector<2x32xf32>
    %318 = arith.addf %315, %317 : vector<2x32xf32>
    %c0_51 = arith.constant 0 : index
    %c0_52 = arith.constant 0 : index
    %319 = vector.load %arg9[%c0_51, %c0_52] : memref<32x32xf32, #tpu.memory_space<vmem>>, vector<32x32xf32>
    %cst_53 = arith.constant dense<0.000000e+00> : vector<2x32xf32>
    %320 = tpu.matmul %169, %319, %cst_53 {dimension_numbers = #tpu.dot_dimension_numbers<[1], [0], [0], [1], [0, 0, 1, 1], [], []>} : vector<2x32xf32>, vector<32x32xf32>, vector<2x32xf32> -> vector<2x32xf32>
    %321 = arith.addf %318, %320 : vector<2x32xf32>
    %c0_54 = arith.constant 0 : index
    %c0_55 = arith.constant 0 : index
    %322 = vector.load %arg10[%c0_54, %c0_55] : memref<1x32xf32, #tpu.memory_space<vmem>>, vector<1x32xf32>
    %323 = vector.broadcast %322 : vector<1x32xf32> to vector<2x32xf32>
    %324 = arith.addf %321, %323 : vector<2x32xf32>
    %325 = math.tanh %324 : vector<2x32xf32>
    %c0_56 = arith.constant 0 : index
    %c0_57 = arith.constant 0 : index
    %326 = vector.load %arg16[%c0_56, %c0_57] : memref<32x128xf32, #tpu.memory_space<vmem>>, vector<32x128xf32>
    %cst_58 = arith.constant dense<0.000000e+00> : vector<2x128xf32>
    %327 = tpu.matmul %325, %326, %cst_58 {dimension_numbers = #tpu.dot_dimension_numbers<[1], [0], [0], [1], [0, 0, 1, 1], [], []>} : vector<2x32xf32>, vector<32x128xf32>, vector<2x128xf32> -> vector<2x128xf32>
    %c0_59 = arith.constant 0 : index
    %c0_60 = arith.constant 0 : index
    %328 = vector.load %arg17[%c0_59, %c0_60] : memref<32x128xf32, #tpu.memory_space<vmem>>, vector<32x128xf32>
    %cst_61 = arith.constant dense<0.000000e+00> : vector<2x128xf32>
    %329 = tpu.matmul %168, %328, %cst_61 {dimension_numbers = #tpu.dot_dimension_numbers<[1], [0], [0], [1], [0, 0, 1, 1], [], []>} : vector<2x32xf32>, vector<32x128xf32>, vector<2x128xf32> -> vector<2x128xf32>
    %330 = arith.addf %327, %329 : vector<2x128xf32>
    %c0_62 = arith.constant 0 : index
    %c0_63 = arith.constant 0 : index
    %331 = vector.load %arg18[%c0_62, %c0_63] : memref<1x128xf32, #tpu.memory_space<vmem>>, vector<1x128xf32>
    %332 = vector.broadcast %331 : vector<1x128xf32> to vector<2x128xf32>
    %333 = arith.addf %330, %332 : vector<2x128xf32>
    %c0_64 = arith.constant 0 : index
    %c0_65 = arith.constant 0 : index
    %334 = vector.load %arg13[%c0_64, %c0_65] : memref<16x2xf32, #tpu.memory_space<vmem>>, vector<16x2xf32>
    %cst_66 = arith.constant dense<0.000000e+00> : vector<16x128xf32>
    %335 = tpu.matmul %334, %333, %cst_66 {dimension_numbers = #tpu.dot_dimension_numbers<[1], [0], [0], [1], [0, 0, 1, 1], [], []>} : vector<16x2xf32>, vector<2x128xf32>, vector<16x128xf32> -> vector<16x128xf32>
    %cst_67 = arith.constant dense<0.000000e+00> : vector<16x32xf32>
    %336 = tpu.matmul %334, %169, %cst_67 {dimension_numbers = #tpu.dot_dimension_numbers<[1], [0], [0], [1], [0, 0, 1, 1], [], []>} : vector<16x2xf32>, vector<2x32xf32>, vector<16x32xf32> -> vector<16x32xf32>
    %c0_68 = arith.constant 0 : index
    %c0_69 = arith.constant 0 : index
    %337 = vector.load %arg11[%c0_68, %c0_69] : memref<16x32xf32, #tpu.memory_space<vmem>>, vector<16x32xf32>
    %c0_70 = arith.constant 0 : index
    %c0_71 = arith.constant 0 : index
    %338 = vector.load %arg15[%c0_70, %c0_71] : memref<32x128xf32, #tpu.memory_space<vmem>>, vector<32x128xf32>
    %cst_72 = arith.constant dense<0.000000e+00> : vector<16x128xf32>
    %339 = tpu.matmul %337, %338, %cst_72 {dimension_numbers = #tpu.dot_dimension_numbers<[1], [0], [0], [1], [0, 0, 1, 1], [], []>} : vector<16x32xf32>, vector<32x128xf32>, vector<16x128xf32> -> vector<16x128xf32>
    %340 = arith.addf %339, %335 : vector<16x128xf32>
    %341 = vector.extract_strided_slice %340 {offsets = [0, 0], sizes = [16, 96], strides = [1, 1]} : vector<16x128xf32> to vector<16x96xf32>
    %342 = arith.negf %341 : vector<16x96xf32>
    %343 = math.exp %342 : vector<16x96xf32>
    %cst_73 = arith.constant 1.000000e+00 : f32
    %344 = vector.broadcast %cst_73 : f32 to vector<16x96xf32>
    %345 = arith.addf %344, %343 : vector<16x96xf32>
    %346 = arith.divf %344, %345 : vector<16x96xf32>
    %347 = vector.extract_strided_slice %340 {offsets = [0, 96], sizes = [16, 32], strides = [1, 1]} : vector<16x128xf32> to vector<16x32xf32>
    %348 = math.tanh %347 : vector<16x32xf32>
    %349 = vector.extract_strided_slice %346 {offsets = [0, 32], sizes = [16, 32], strides = [1, 1]} : vector<16x96xf32> to vector<16x32xf32>
    %350 = arith.mulf %349, %336 : vector<16x32xf32>
    %351 = vector.extract_strided_slice %346 {offsets = [0, 0], sizes = [16, 32], strides = [1, 1]} : vector<16x96xf32> to vector<16x32xf32>
    %352 = arith.mulf %351, %348 : vector<16x32xf32>
    %353 = arith.addf %350, %352 : vector<16x32xf32>
    %354 = vector.extract_strided_slice %346 {offsets = [0, 64], sizes = [16, 32], strides = [1, 1]} : vector<16x96xf32> to vector<16x32xf32>
    %355 = math.tanh %353 : vector<16x32xf32>
    %356 = arith.mulf %354, %355 : vector<16x32xf32>
    %c0_74 = arith.constant 0 : index
    %c0_75 = arith.constant 0 : index
    %357 = vector.load %arg19[%c0_74, %c0_75] : memref<32x128xf32, #tpu.memory_space<vmem>>, vector<32x128xf32>
    %cst_76 = arith.constant dense<0.000000e+00> : vector<16x128xf32>
    %358 = tpu.matmul %356, %357, %cst_76 {dimension_numbers = #tpu.dot_dimension_numbers<[1], [0], [0], [1], [0, 0, 1, 1], [], []>} : vector<16x32xf32>, vector<32x128xf32>, vector<16x128xf32> -> vector<16x128xf32>
    %c0_77 = arith.constant 0 : index
    %c0_78 = arith.constant 0 : index
    %359 = vector.load %arg20[%c0_77, %c0_78] : memref<1x128xf32, #tpu.memory_space<vmem>>, vector<1x128xf32>
    %360 = vector.broadcast %359 : vector<1x128xf32> to vector<16x128xf32>
    %361 = arith.addf %358, %360 : vector<16x128xf32>
    %cst_79 = arith.constant dense<0xFF800000> : vector<16xf32>
    %362 = vector.multi_reduction <maximumf>, %361, %cst_79 [1] : vector<16x128xf32> to vector<16xf32>
    %363 = vector.shape_cast %362 : vector<16xf32> to vector<16x1xf32>
    %364 = vector.broadcast %363 : vector<16x1xf32> to vector<16x128xf32>
    %365 = arith.subf %361, %364 : vector<16x128xf32>
    %366 = math.exp %365 : vector<16x128xf32>
    %cst_80 = arith.constant dense<0.000000e+00> : vector<16xf32>
    %367 = vector.multi_reduction <add>, %366, %cst_80 [1] : vector<16x128xf32> to vector<16xf32>
    %368 = vector.shape_cast %367 : vector<16xf32> to vector<16x1xf32>
    %369 = math.log %368 : vector<16x1xf32>
    %370 = arith.addf %363, %369 : vector<16x1xf32>
    %371 = tpu.iota {dimensions = array<i32: 1>} : vector<16x128xi32>
    %c0_81 = arith.constant 0 : index
    %c0_82 = arith.constant 0 : index
    %372 = vector.load %arg12[%c0_81, %c0_82] : memref<16x1xi32, #tpu.memory_space<vmem>>, vector<16x1xi32>
    %373 = vector.broadcast %372 : vector<16x1xi32> to vector<16x128xi32>
    %374 = arith.cmpi eq, %371, %373 : vector<16x128xi32>
    %cst_83 = arith.constant 0.000000e+00 : f32
    %375 = vector.broadcast %cst_83 : f32 to vector<16x128xf32>
    %376 = arith.select %374, %361, %375 : vector<16x128xi1>, vector<16x128xf32>
    %cst_84 = arith.constant dense<0.000000e+00> : vector<16xf32>
    %377 = vector.multi_reduction <add>, %376, %cst_84 [1] : vector<16x128xf32> to vector<16xf32>
    %378 = vector.shape_cast %377 : vector<16xf32> to vector<16x1xf32>
    %379 = arith.subf %370, %378 : vector<16x1xf32>
    %c0_85 = arith.constant 0 : index
    %c0_86 = arith.constant 0 : index
    %380 = vector.load %arg14[%c0_85, %c0_86] : memref<16x1xf32, #tpu.memory_space<vmem>>, vector<16x1xf32>
    %381 = arith.mulf %379, %380 : vector<16x1xf32>
    %cst_87 = arith.constant dense<0.000000e+00> : vector<1xf32>
    %382 = vector.multi_reduction <add>, %381, %cst_87 [0] : vector<16x1xf32> to vector<1xf32>
    %383 = vector.shape_cast %382 : vector<1xf32> to vector<1x1xf32>
    %cst_88 = arith.constant 5.000000e-01 : f32
    %384 = vector.broadcast %cst_88 : f32 to vector<1x1xf32>
    %385 = arith.mulf %383, %384 : vector<1x1xf32>
    %c0_89 = arith.constant 0 : index
    %c0_90 = arith.constant 0 : index
    %386 = vector.load %arg21[%c0_89, %c0_90] : memref<1x1xf32, #tpu.memory_space<vmem>>, vector<1x1xf32>
    tpu.vector_store %arg21[%c0_89, %c0_90], %385 {strides = array<i32>} : memref<1x1xf32, #tpu.memory_space<vmem>>, vector<1x1xf32>,
    return
  }
}

</mosaic_0001>

<llo_original>
// kernel: seq2seq_forward.1
$region0: #{seq2seq_forward.1}
  #allocation0 [shape = 'u32[]', space=smem, size = 0x4, offset = 0x4, fixed_abs, tag = 'smem constant byte address 0x4 - core index']
  #allocation1 [shape = 'u32[72,128]{1,0:T(1,128)}', space=vmem, size = 0x9000, scoped, tag = 'internal scratch']
  %s0 = inlined_call_operand.vmem [shape: f32[16,64], index: 0, kind: input, shape index: {}]
  %s1 = inlined_call_operand.vmem [shape: f32[64,256], index: 1, kind: input, shape index: {}]
  %s2 = inlined_call_operand.vmem [shape: f32[64,256], index: 2, kind: input, shape index: {}]
  %s3 = inlined_call_operand.vmem [shape: f32[1,256], index: 3, kind: input, shape index: {}]
  %s4 = inlined_call_operand.vmem [shape: f32[64,32], index: 4, kind: input, shape index: {}]
  %s5 = inlined_call_operand.vmem [shape: f32[1,32], index: 5, kind: input, shape index: {}]
  %s6 = inlined_call_operand.vmem [shape: f32[32,64], index: 6, kind: input, shape index: {}]
  %s7 = inlined_call_operand.vmem [shape: f32[32,32], index: 7, kind: input, shape index: {}]
  %s8 = inlined_call_operand.vmem [shape: f32[32,32], index: 8, kind: input, shape index: {}]
  %s9 = inlined_call_operand.vmem [shape: f32[32,32], index: 9, kind: input, shape index: {}]
  %s10 = inlined_call_operand.vmem [shape: f32[1,32], index: 10, kind: input, shape index: {}]
  %s11 = inlined_call_operand.vmem [shape: f32[16,32], index: 11, kind: input, shape index: {}]
  %s12 = inlined_call_operand.vmem [shape: s32[16,1], index: 12, kind: input, shape index: {}]
  %s13 = inlined_call_operand.vmem [shape: f32[16,2], index: 13, kind: input, shape index: {}]
  %s14 = inlined_call_operand.vmem [shape: f32[16,1], index: 14, kind: input, shape index: {}]
  %s15 = inlined_call_operand.vmem [shape: f32[32,128], index: 15, kind: input, shape index: {}]
  %s16 = inlined_call_operand.vmem [shape: f32[32,128], index: 16, kind: input, shape index: {}]
  %s17 = inlined_call_operand.vmem [shape: f32[32,128], index: 17, kind: input, shape index: {}]
  %s18 = inlined_call_operand.vmem [shape: f32[1,128], index: 18, kind: input, shape index: {}]
  %s19 = inlined_call_operand.vmem [shape: f32[32,128], index: 19, kind: input, shape index: {}]
  %s20 = inlined_call_operand.vmem [shape: f32[1,128], index: 20, kind: input, shape index: {}]
  %s21 = inlined_call_operand.hbm [shape: f32[1,1], index: 21, kind: output, shape index: {}]
  %s22 = sld [smem:[#allocation0]]
  $region94: #{seq2seq_forward.1} parent=0
    _
  %s24 = ssub.s32 1, %s22
  %s25 = scalar_select 0, %s24, %s22
  $region1: #{seq2seq_forward.1} parent=0
    #allocation2 [shape = 'u8[512]{0}', space=vmem, size = 0x400, scoped, tag = 'output window, operand 0, single buffered']
    #allocation3 [shape = 's32[1]{0}', space=sflag, size = 0x4, scoped, tag = 'scoped memory for seq2seq_forward.1']
    %26 = vsyncpa [#allocation3], 0
    // Predicated region
    $region2: #{seq2seq_forward.1} parent=1 // pred_check
      _
    $region3: #{seq2seq_forward.1} parent=1 // pred_check_branch
      %28 = sbr.rel (0) target = $region5
    $region4: #{seq2seq_forward.1} parent=1 // pred_region
      _
    $region5: #{seq2seq_forward.1} parent=1 // pred_fallthru
      _
    // Predicated region
    $region6: #{seq2seq_forward.1} parent=1 // pred_check
      _
    $region7: #{seq2seq_forward.1} parent=1 // pred_check_branch
      %30 = sbr.rel (0) target = $region9
    $region8: #{seq2seq_forward.1} parent=1 // pred_region
      _
    $region9: #{seq2seq_forward.1} parent=1 // pred_fallthru
      _
    // Predicated region
    $region10: #{seq2seq_forward.1} parent=1 // pred_check
      _
    $region11: #{seq2seq_forward.1} parent=1 // pred_check_branch
      %32 = sbr.rel (0) target = $region13
    $region12: #{seq2seq_forward.1} parent=1 // pred_region
      _
    $region13: #{seq2seq_forward.1} parent=1 // pred_fallthru
      _
    // Predicated region
    $region14: #{seq2seq_forward.1} parent=1 // pred_check
      _
    $region15: #{seq2seq_forward.1} parent=1 // pred_check_branch
      %34 = sbr.rel (0) target = $region17
    $region16: #{seq2seq_forward.1} parent=1 // pred_region
      _
    $region17: #{seq2seq_forward.1} parent=1 // pred_fallthru
      _
    // Predicated region
    $region18: #{seq2seq_forward.1} parent=1 // pred_check
      _
    $region19: #{seq2seq_forward.1} parent=1 // pred_check_branch
      %36 = sbr.rel (0) target = $region21
    $region20: #{seq2seq_forward.1} parent=1 // pred_region
      _
    $region21: #{seq2seq_forward.1} parent=1 // pred_fallthru
      _
    // Predicated region
    $region22: #{seq2seq_forward.1} parent=1 // pred_check
      _
    $region23: #{seq2seq_forward.1} parent=1 // pred_check_branch
      %38 = sbr.rel (0) target = $region25
    $region24: #{seq2seq_forward.1} parent=1 // pred_region
      _
    $region25: #{seq2seq_forward.1} parent=1 // pred_fallthru
      _
    // Predicated region
    $region26: #{seq2seq_forward.1} parent=1 // pred_check
      _
    $region27: #{seq2seq_forward.1} parent=1 // pred_check_branch
      %40 = sbr.rel (0) target = $region29
    $region28: #{seq2seq_forward.1} parent=1 // pred_region
      _
    $region29: #{seq2seq_forward.1} parent=1 // pred_fallthru
      _
    // Predicated region
    $region30: #{seq2seq_forward.1} parent=1 // pred_check
      _
    $region31: #{seq2seq_forward.1} parent=1 // pred_check_branch
      %42 = sbr.rel (0) target = $region33
    $region32: #{seq2seq_forward.1} parent=1 // pred_region
      _
    $region33: #{seq2seq_forward.1} parent=1 // pred_fallthru
      _
    // Predicated region
    $region34: #{seq2seq_forward.1} parent=1 // pred_check
      _
    $region35: #{seq2seq_forward.1} parent=1 // pred_check_branch
      %44 = sbr.rel (0) target = $region37
    $region36: #{seq2seq_forward.1} parent=1 // pred_region
      _
    $region37: #{seq2seq_forward.1} parent=1 // pred_fallthru
      _
    // Predicated region
    $region38: #{seq2seq_forward.1} parent=1 // pred_check
      _
    $region39: #{seq2seq_forward.1} parent=1 // pred_check_branch
      %46 = sbr.rel (0) target = $region41
    $region40: #{seq2seq_forward.1} parent=1 // pred_region
      _
    $region41: #{seq2seq_forward.1} parent=1 // pred_fallthru
      _
    // Predicated region
    $region42: #{seq2seq_forward.1} parent=1 // pred_check
      _
    $region43: #{seq2seq_forward.1} parent=1 // pred_check_branch
      %48 = sbr.rel (0) target = $region45
    $region44: #{seq2seq_forward.1} parent=1 // pred_region
      _
    $region45: #{seq2seq_forward.1} parent=1 // pred_fallthru
      _
    // Predicated region
    $region46: #{seq2seq_forward.1} parent=1 // pred_check
      _
    $region47: #{seq2seq_forward.1} parent=1 // pred_check_branch
      %50 = sbr.rel (0) target = $region49
    $region48: #{seq2seq_forward.1} parent=1 // pred_region
      _
    $region49: #{seq2seq_forward.1} parent=1 // pred_fallthru
      _
    // Predicated region
    $region50: #{seq2seq_forward.1} parent=1 // pred_check
      _
    $region51: #{seq2seq_forward.1} parent=1 // pred_check_branch
      %52 = sbr.rel (0) target = $region53
    $region52: #{seq2seq_forward.1} parent=1 // pred_region
      _
    $region53: #{seq2seq_forward.1} parent=1 // pred_fallthru
      _
    // Predicated region
    $region54: #{seq2seq_forward.1} parent=1 // pred_check
      _
    $region55: #{seq2seq_forward.1} parent=1 // pred_check_branch
      %54 = sbr.rel (0) target = $region57
    $region56: #{seq2seq_forward.1} parent=1 // pred_region
      _
    $region57: #{seq2seq_forward.1} parent=1 // pred_fallthru
      _
    // Predicated region
    $region58: #{seq2seq_forward.1} parent=1 // pred_check
      _
    $region59: #{seq2seq_forward.1} parent=1 // pred_check_branch
      %56 = sbr.rel (0) target = $region61
    $region60: #{seq2seq_forward.1} parent=1 // pred_region
      _
    $region61: #{seq2seq_forward.1} parent=1 // pred_fallthru
      _
    // Predicated region
    $region62: #{seq2seq_forward.1} parent=1 // pred_check
      _
    $region63: #{seq2seq_forward.1} parent=1 // pred_check_branch
      %58 = sbr.rel (0) target = $region65
    $region64: #{seq2seq_forward.1} parent=1 // pred_region
      _
    $region65: #{seq2seq_forward.1} parent=1 // pred_fallthru
      _
    // Predicated region
    $region66: #{seq2seq_forward.1} parent=1 // pred_check
      _
    $region67: #{seq2seq_forward.1} parent=1 // pred_check_branch
      %60 = sbr.rel (0) target = $region69
    $region68: #{seq2seq_forward.1} parent=1 // pred_region
      _
    $region69: #{seq2seq_forward.1} parent=1 // pred_fallthru
      _
    // Predicated region
    $region70: #{seq2seq_forward.1} parent=1 // pred_check
      _
    $region71: #{seq2seq_forward.1} parent=1 // pred_check_branch
      %62 = sbr.rel (0) target = $region73
    $region72: #{seq2seq_forward.1} parent=1 // pred_region
      _
    $region73: #{seq2seq_forward.1} parent=1 // pred_fallthru
      _
    // Predicated region
    $region74: #{seq2seq_forward.1} parent=1 // pred_check
      _
    $region75: #{seq2seq_forward.1} parent=1 // pred_check_branch
      %64 = sbr.rel (0) target = $region77
    $region76: #{seq2seq_forward.1} parent=1 // pred_region
      _
    $region77: #{seq2seq_forward.1} parent=1 // pred_fallthru
      _
    // Predicated region
    $region78: #{seq2seq_forward.1} parent=1 // pred_check
      _
    $region79: #{seq2seq_forward.1} parent=1 // pred_check_branch
      %66 = sbr.rel (0) target = $region81
    $region80: #{seq2seq_forward.1} parent=1 // pred_region
      _
    $region81: #{seq2seq_forward.1} parent=1 // pred_fallthru
      _
    // Predicated region
    $region82: #{seq2seq_forward.1} parent=1 // pred_check
      _
    $region83: #{seq2seq_forward.1} parent=1 // pred_check_branch
      %68 = sbr.rel (0) target = $region85
    $region84: #{seq2seq_forward.1} parent=1 // pred_region
      _
    $region85: #{seq2seq_forward.1} parent=1 // pred_fallthru
      _
    %v69 = vld [vmem:[%s0] sm:$0xff]
    %v70 = vld [vmem:[%s0 + $0x8] sm:$0xff]
    %v71 = vld [vmem:[%s1] sm:$0xff]
    %v72 = vld [vmem:[%s1 + $0x8] sm:$0xff]
    %v73 = vld [vmem:[%s1 + $0x10] sm:$0xff]
    %v74 = vld [vmem:[%s1 + $0x18] sm:$0xff]
    %v75 = vld [vmem:[%s1 + $0x20] sm:$0xff]
    %v76 = vld [vmem:[%s1 + $0x28] sm:$0xff]
    %v77 = vld [vmem:[%s1 + $0x30] sm:$0xff]
    %v78 = vld [vmem:[%s1 + $0x38] sm:$0xff]
    %v79 = vld [vmem:[%s1 + $0x40] sm:$0xff]
    %v80 = vld [vmem:[%s1 + $0x48] sm:$0xff]
    %v81 = vld [vmem:[%s1 + $0x50] sm:$0xff]
    %v82 = vld [vmem:[%s1 + $0x58] sm:$0xff]
    %v83 = vld [vmem:[%s1 + $0x60] sm:$0xff]
    %v84 = vld [vmem:[%s1 + $0x68] sm:$0xff]
    %v85 = vld [vmem:[%s1 + $0x70] sm:$0xff]
    %v86 = vld [vmem:[%s1 + $0x78] sm:$0xff]
    %v87 = vld [vmem:[%s3] sm:$0x3]
    %v89 = vperm.slane %v87, 0
    %v90 = vperm.slane %v87, 1
    %vm93 = vcmask 523264
    %v95 = vsel %vm93, %v69, 0
    %v98 = vsel %vm93, %v70, 0
    %100 = vmatpush.msra.mxu0 0.0
    %101 = vmatpush.msra.mxu0 0.0
    %102 = vmatpush.msra.mxu0 0.0
    %103 = vmatpush.msra.mxu0 0.0
    %104 = vmatpush.msra.mxu0 0.0
    %105 = vmatpush.msra.mxu0 0.0
    %106 = vmatpush.msra.mxu0 0.0
    %107 = vmatpush.msra.mxu0 0.0
    %108 = vmatpush.msra.mxu0 %v85
    %109 = vmatpush.msra.mxu0 %v83
    %110 = vmatpush.msra.mxu0 %v81
    %111 = vmatpush.msra.mxu0 %v79
    %112 = vmatpush.msra.mxu0 %v77
    %113 = vmatpush.msra.mxu0 %v75
    %114 = vmatpush.msra.mxu0 %v73
    %115 = vmatpush.msra.mxu0 %v71
    %116 = vmatmul.f32.gmra.mxu0 %v95
    %v117 = vpop.f32.mrf.mxu0
    %v118 = vadd.f32 %v89, %v117
    %119 = vmatmul.f32.gmra.mxu0 %v98
    %v120 = vpop.f32.mrf.mxu0
    %v121 = vadd.f32 %v89, %v120
    %122 = vdwg.mxu0
    %123 = vmatpush.msra.mxu0 0.0
    %124 = vmatpush.msra.mxu0 0.0
    %125 = vmatpush.msra.mxu0 0.0
    %126 = vmatpush.msra.mxu0 0.0
    %127 = vmatpush.msra.mxu0 0.0
    %128 = vmatpush.msra.mxu0 0.0
    %129 = vmatpush.msra.mxu0 0.0
    %130 = vmatpush.msra.mxu0 0.0
    %131 = vmatpush.msra.mxu0 %v86
    %132 = vmatpush.msra.mxu0 %v84
    %133 = vmatpush.msra.mxu0 %v82
    %134 = vmatpush.msra.mxu0 %v80
    %135 = vmatpush.msra.mxu0 %v78
    %136 = vmatpush.msra.mxu0 %v76
    %137 = vmatpush.msra.mxu0 %v74
    %138 = vmatpush.msra.mxu0 %v72
    %139 = vmatmul.f32.gmra.mxu0 %v95
    %v140 = vpop.f32.mrf.mxu0
    %v141 = vadd.f32 %v90, %v140
    %142 = vmatmul.f32.gmra.mxu0 %v98
    %v143 = vpop.f32.mrf.mxu0
    %v144 = vadd.f32 %v90, %v143
    %145 = vdwg.mxu0
    %v146 = vld [vmem:[%s2] sm:$0xff]
    %v147 = vld [vmem:[%s2 + $0x8] sm:$0xff]
    %v148 = vld [vmem:[%s2 + $0x10] sm:$0xff]
    %v149 = vld [vmem:[%s2 + $0x18] sm:$0xff]
    %v150 = vld [vmem:[%s2 + $0x20] sm:$0xff]
    %v151 = vld [vmem:[%s2 + $0x28] sm:$0xff]
    %v152 = vld [vmem:[%s2 + $0x30] sm:$0xff]
    %v153 = vld [vmem:[%s2 + $0x38] sm:$0xff]
    %v154 = vld [vmem:[%s2 + $0x40] sm:$0xff]
    %v155 = vld [vmem:[%s2 + $0x48] sm:$0xff]
    %v156 = vld [vmem:[%s2 + $0x50] sm:$0xff]
    %v157 = vld [vmem:[%s2 + $0x58] sm:$0xff]
    %v158 = vld [vmem:[%s2 + $0x60] sm:$0xff]
    %v159 = vld [vmem:[%s2 + $0x68] sm:$0xff]
    %v160 = vld [vmem:[%s2 + $0x70] sm:$0xff]
    %v161 = vld [vmem:[%s2 + $0x78] sm:$0xff]
    %v163 = vsel %vm93, 0.0, 0
    %165 = vmatpush.msra.mxu0 0.0
    %166 = vmatpush.msra.mxu0 0.0
    %167 = vmatpush.msra.mxu0 0.0
    %168 = vmatpush.msra.mxu0 0.0
    %169 = vmatpush.msra.mxu0 0.0
    %170 = vmatpush.msra.mxu0 0.0
    %171 = vmatpush.msra.mxu0 0.0
    %172 = vmatpush.msra.mxu0 0.0
    %173 = vmatpush.msra.mxu0 %v160
    %174 = vmatpush.msra.mxu0 %v158
    %175 = vmatpush.msra.mxu0 %v156
    %176 = vmatpush.msra.mxu0 %v154
    %177 = vmatpush.msra.mxu0 %v152
    %178 = vmatpush.msra.mxu0 %v150
    %179 = vmatpush.msra.mxu0 %v148
    %180 = vmatpush.msra.mxu0 %v146
    %181 = vmatmul.f32.gmra.mxu0 %v163
    %v182 = vpop.f32.mrf.mxu0
    %v183 = vadd.f32 0.0, %v182
    %184 = vdwg.mxu0
    %185 = vmatpush.msra.mxu0 0.0
    %186 = vmatpush.msra.mxu0 0.0
    %187 = vmatpush.msra.mxu0 0.0
    %188 = vmatpush.msra.mxu0 0.0
    %189 = vmatpush.msra.mxu0 0.0
    %190 = vmatpush.msra.mxu0 0.0
    %191 = vmatpush.msra.mxu0 0.0
    %192 = vmatpush.msra.mxu0 0.0
    %193 = vmatpush.msra.mxu0 %v161
    %194 = vmatpush.msra.mxu0 %v159
    %195 = vmatpush.msra.mxu0 %v157
    %196 = vmatpush.msra.mxu0 %v155
    %197 = vmatpush.msra.mxu0 %v153
    %198 = vmatpush.msra.mxu0 %v151
    %199 = vmatpush.msra.mxu0 %v149
    %200 = vmatpush.msra.mxu0 %v147
    %201 = vmatmul.f32.gmra.mxu0 %v163
    %v202 = vpop.f32.mrf.mxu0
    %v203 = vadd.f32 0.0, %v202
    %204 = vdwg.mxu0
    %v205 = vadd.f32 %v118, %v183
    %v206 = vadd.f32 %v141, %v203
    %v207 = vxor.u32 %v205, 2147483648
    %v208 = vxor.u32 %v206, 2147483648
    %v209 = vmul.f32 %v207, 1.442695
    %v210 = vpow.pop %v209
    %v211 = vmul.f32 %v208, 1.442695
    %v212 = vpow.pop %v211
    %v213 = vadd.f32 %v210, 1.0
    %v214 = vadd.f32 %v212, 1.0
    %v215 = vrcp.pop %v213
    %v216 = vmul.f32 %v213, %v215
    %v217 = vsub.f32 1.0, %v216
    %v218 = vmul.f32 %v215, %v217
    %v219 = vadd.f32 %v215, %v218
    %vm220 = vweird.f32 %v213
    %vm221 = vweird.f32 %v215
    %vm222 = vmor %vm220, %vm221
    %v223 = vsel %vm222, %v215, %v219
    %v224 = vand.u32 2147483647, %v213
    %vm225 = vcmp.eq.f32.partialorder %v224, 8.507059e+37
    %v226 = vand.u32 %v213, 2147483648
    %v227 = vor.u32 1.1754944e-38, %v226
    %v228 = vsel %vm225, %v227, %v223
    %v229 = vmul.f32 1.0, %v228
    %v230 = vrcp.pop %v214
    %v231 = vmul.f32 %v214, %v230
    %v232 = vsub.f32 1.0, %v231
    %v233 = vmul.f32 %v230, %v232
    %v234 = vadd.f32 %v230, %v233
    %vm235 = vweird.f32 %v214
    %vm236 = vweird.f32 %v230
    %vm237 = vmor %vm235, %vm236
    %v238 = vsel %vm237, %v230, %v234
    %v239 = vand.u32 2147483647, %v214
    %vm240 = vcmp.eq.f32.partialorder %v239, 8.507059e+37
    %v241 = vand.u32 %v214, 2147483648
    %v242 = vor.u32 1.1754944e-38, %v241
    %v243 = vsel %vm240, %v242, %v238
    %v244 = vmul.f32 1.0, %v243
    %v245 = vtanh.pop %v206
    %v246 = vmul.f32 %v229, 0.0
    %248 = vrot.lane.b32.xlu0 %v245, 64
    %v249 = vpop.permute.xlu0 %248
    %v251 = vmul.f32 %v229, %v249
    %253 = vrot.lane.b32.xlu0 %v251, 64
    %v254 = vpop.permute.xlu0 %253
    %v256 = vadd.f32 %v246, %v254
    %v257 = vtanh.pop %v256
    %259 = vrot.lane.b32.xlu0 %v257, 64
    %v260 = vpop.permute.xlu0 %259
    %v262 = vmul.f32 %v244, %v260
    %v264 = vsel %vm93, %v262, 0
    %266 = vmatpush.msra.mxu0 0.0
    %267 = vmatpush.msra.mxu0 0.0
    %268 = vmatpush.msra.mxu0 0.0
    %269 = vmatpush.msra.mxu0 0.0
    %270 = vmatpush.msra.mxu0 0.0
    %271 = vmatpush.msra.mxu0 0.0
    %272 = vmatpush.msra.mxu0 0.0
    %273 = vmatpush.msra.mxu0 0.0
    %274 = vmatpush.msra.mxu0 %v160
    %275 = vmatpush.msra.mxu0 %v158
    %276 = vmatpush.msra.mxu0 %v156
    %277 = vmatpush.msra.mxu0 %v154
    %278 = vmatpush.msra.mxu0 %v152
    %279 = vmatpush.msra.mxu0 %v150
    %280 = vmatpush.msra.mxu0 %v148
    %281 = vmatpush.msra.mxu0 %v146
    %282 = vmatmul.f32.gmra.mxu0 %v264
    %v283 = vpop.f32.mrf.mxu0
    %v284 = vadd.f32 0.0, %v283
    %285 = vdwg.mxu0
    %286 = vmatpush.msra.mxu0 0.0
    %287 = vmatpush.msra.mxu0 0.0
    %288 = vmatpush.msra.mxu0 0.0
    %289 = vmatpush.msra.mxu0 0.0
    %290 = vmatpush.msra.mxu0 0.0
    %291 = vmatpush.msra.mxu0 0.0
    %292 = vmatpush.msra.mxu0 0.0
    %293 = vmatpush.msra.mxu0 0.0
    %294 = vmatpush.msra.mxu0 %v161
    %295 = vmatpush.msra.mxu0 %v159
    %296 = vmatpush.msra.mxu0 %v157
    %297 = vmatpush.msra.mxu0 %v155
    %298 = vmatpush.msra.mxu0 %v153
    %299 = vmatpush.msra.mxu0 %v151
    %300 = vmatpush.msra.mxu0 %v149
    %301 = vmatpush.msra.mxu0 %v147
    %302 = vmatmul.f32.gmra.mxu0 %v264
    %v303 = vpop.f32.mrf.mxu0
    %v304 = vadd.f32 0.0, %v303
    %305 = vdwg.mxu0
    %v308 = vrot.slane %v284, 6
    %v309 = vrot.slane %v304, 6
    %v312 = vadd.f32 %v118, %v308
    %v313 = vadd.f32 %v141, %v309
    %v314 = vxor.u32 %v312, 2147483648
    %v315 = vxor.u32 %v313, 2147483648
    %v316 = vmul.f32 %v314, 1.442695
    %v317 = vpow.pop %v316
    %v318 = vmul.f32 %v315, 1.442695
    %v319 = vpow.pop %v318
    %v320 = vadd.f32 %v317, 1.0
    %v321 = vadd.f32 %v319, 1.0
    %v322 = vrcp.pop %v320
    %v323 = vmul.f32 %v320, %v322
    %v324 = vsub.f32 1.0, %v323
    %v325 = vmul.f32 %v322, %v324
    %v326 = vadd.f32 %v322, %v325
    %vm327 = vweird.f32 %v320
    %vm328 = vweird.f32 %v322
    %vm329 = vmor %vm327, %vm328
    %v330 = vsel %vm329, %v322, %v326
    %v331 = vand.u32 2147483647, %v320
    %vm332 = vcmp.eq.f32.partialorder %v331, 8.507059e+37
    %v333 = vand.u32 %v320, 2147483648
    %v334 = vor.u32 1.1754944e-38, %v333
    %v335 = vsel %vm332, %v334, %v330
    %v336 = vmul.f32 1.0, %v335
    %v337 = vrcp.pop %v321
    %v338 = vmul.f32 %v321, %v337
    %v339 = vsub.f32 1.0, %v338
    %v340 = vmul.f32 %v337, %v339
    %v341 = vadd.f32 %v337, %v340
    %vm342 = vweird.f32 %v321
    %vm343 = vweird.f32 %v337
    %vm344 = vmor %vm342, %vm343
    %v345 = vsel %vm344, %v337, %v341
    %v346 = vand.u32 2147483647, %v321
    %vm347 = vcmp.eq.f32.partialorder %v346, 8.507059e+37
    %v348 = vand.u32 %v321, 2147483648
    %v349 = vor.u32 1.1754944e-38, %v348
    %v350 = vsel %vm347, %v349, %v345
    %v351 = vmul.f32 1.0, %v350
    %v352 = vtanh.pop %v313
    %v354 = vrot.slane %v256, 6
    %v356 = vmul.f32 %v336, %v354
    %358 = vrot.lane.b32.xlu0 %v352, 64
    %v359 = vpop.permute.xlu0 %358
    %v361 = vmul.f32 %v336, %v359
    %363 = vrot.lane.b32.xlu0 %v361, 64
    %v364 = vpop.permute.xlu0 %363
    %v366 = vadd.f32 %v356, %v364
    %v367 = vtanh.pop %v366
    %369 = vrot.lane.b32.xlu0 %v367, 64
    %v370 = vpop.permute.xlu0 %369
    %v372 = vmul.f32 %v351, %v370
    %v374 = vrot.slane %v372, 2
    %v375 = vsel %vm93, %v374, 0
    %377 = vmatpush.msra.mxu0 0.0
    %378 = vmatpush.msra.mxu0 0.0
    %379 = vmatpush.msra.mxu0 0.0
    %380 = vmatpush.msra.mxu0 0.0
    %381 = vmatpush.msra.mxu0 0.0
    %382 = vmatpush.msra.mxu0 0.0
    %383 = vmatpush.msra.mxu0 0.0
    %384 = vmatpush.msra.mxu0 0.0
    %385 = vmatpush.msra.mxu0 %v160
    %386 = vmatpush.msra.mxu0 %v158
    %387 = vmatpush.msra.mxu0 %v156
    %388 = vmatpush.msra.mxu0 %v154
    %389 = vmatpush.msra.mxu0 %v152
    %390 = vmatpush.msra.mxu0 %v150
    %391 = vmatpush.msra.mxu0 %v148
    %392 = vmatpush.msra.mxu0 %v146
    %393 = vmatmul.f32.gmra.mxu0 %v375
    %v394 = vpop.f32.mrf.mxu0
    %v395 = vadd.f32 0.0, %v394
    %396 = vdwg.mxu0
    %397 = vmatpush.msra.mxu0 0.0
    %398 = vmatpush.msra.mxu0 0.0
    %399 = vmatpush.msra.mxu0 0.0
    %400 = vmatpush.msra.mxu0 0.0
    %401 = vmatpush.msra.mxu0 0.0
    %402 = vmatpush.msra.mxu0 0.0
    %403 = vmatpush.msra.mxu0 0.0
    %404 = vmatpush.msra.mxu0 0.0
    %405 = vmatpush.msra.mxu0 %v161
    %406 = vmatpush.msra.mxu0 %v159
    %407 = vmatpush.msra.mxu0 %v157
    %408 = vmatpush.msra.mxu0 %v155
    %409 = vmatpush.msra.mxu0 %v153
    %410 = vmatpush.msra.mxu0 %v151
    %411 = vmatpush.msra.mxu0 %v149
    %412 = vmatpush.msra.mxu0 %v147
    %413 = vmatmul.f32.gmra.mxu0 %v375
    %v414 = vpop.f32.mrf.mxu0
    %v415 = vadd.f32 0.0, %v414
    %416 = vdwg.mxu0
    %v419 = vrot.slane %v395, 4
    %v420 = vrot.slane %v415, 4
    %v423 = vadd.f32 %v118, %v419
    %v424 = vadd.f32 %v141, %v420
    %v425 = vxor.u32 %v423, 2147483648
    %v426 = vxor.u32 %v424, 2147483648
    %v427 = vmul.f32 %v425, 1.442695
    %v428 = vpow.pop %v427
    %v429 = vmul.f32 %v426, 1.442695
    %v430 = vpow.pop %v429
    %v431 = vadd.f32 %v428, 1.0
    %v432 = vadd.f32 %v430, 1.0
    %v433 = vrcp.pop %v431
    %v434 = vmul.f32 %v431, %v433
    %v435 = vsub.f32 1.0, %v434
    %v436 = vmul.f32 %v433, %v435
    %v437 = vadd.f32 %v433, %v436
    %vm438 = vweird.f32 %v431
    %vm439 = vweird.f32 %v433
    %vm440 = vmor %vm438, %vm439
    %v441 = vsel %vm440, %v433, %v437
    %v442 = vand.u32 2147483647, %v431
    %vm443 = vcmp.eq.f32.partialorder %v442, 8.507059e+37
    %v444 = vand.u32 %v431, 2147483648
    %v445 = vor.u32 1.1754944e-38, %v444
    %v446 = vsel %vm443, %v445, %v441
    %v447 = vmul.f32 1.0, %v446
    %v448 = vrcp.pop %v432
    %v449 = vmul.f32 %v432, %v448
    %v450 = vsub.f32 1.0, %v449
    %v451 = vmul.f32 %v448, %v450
    %v452 = vadd.f32 %v448, %v451
    %vm453 = vweird.f32 %v432
    %vm454 = vweird.f32 %v448
    %vm455 = vmor %vm453, %vm454
    %v456 = vsel %vm455, %v448, %v452
    %v457 = vand.u32 2147483647, %v432
    %vm458 = vcmp.eq.f32.partialorder %v457, 8.507059e+37
    %v459 = vand.u32 %v432, 2147483648
    %v460 = vor.u32 1.1754944e-38, %v459
    %v461 = vsel %vm458, %v460, %v456
    %v462 = vmul.f32 1.0, %v461
    %v463 = vtanh.pop %v424
    %v465 = vrot.slane %v366, 6
    %v467 = vmul.f32 %v447, %v465
    %469 = vrot.lane.b32.xlu0 %v463, 64
    %v470 = vpop.permute.xlu0 %469
    %v472 = vmul.f32 %v447, %v470
    %474 = vrot.lane.b32.xlu0 %v472, 64
    %v475 = vpop.permute.xlu0 %474
    %v477 = vadd.f32 %v467, %v475
    %v478 = vtanh.pop %v477
    %480 = vrot.lane.b32.xlu0 %v478, 64
    %v481 = vpop.permute.xlu0 %480
    %v483 = vmul.f32 %v462, %v481
    %v485 = vrot.slane %v483, 4
    %v486 = vsel %vm93, %v485, 0
    %488 = vmatpush.msra.mxu0 0.0
    %489 = vmatpush.msra.mxu0 0.0
    %490 = vmatpush.msra.mxu0 0.0
    %491 = vmatpush.msra.mxu0 0.0
    %492 = vmatpush.msra.mxu0 0.0
    %493 = vmatpush.msra.mxu0 0.0
    %494 = vmatpush.msra.mxu0 0.0
    %495 = vmatpush.msra.mxu0 0.0
    %496 = vmatpush.msra.mxu0 %v160
    %497 = vmatpush.msra.mxu0 %v158
    %498 = vmatpush.msra.mxu0 %v156
    %499 = vmatpush.msra.mxu0 %v154
    %500 = vmatpush.msra.mxu0 %v152
    %501 = vmatpush.msra.mxu0 %v150
    %502 = vmatpush.msra.mxu0 %v148
    %503 = vmatpush.msra.mxu0 %v146
    %504 = vmatmul.f32.gmra.mxu0 %v486
    %v505 = vpop.f32.mrf.mxu0
    %v506 = vadd.f32 0.0, %v505
    %507 = vdwg.mxu0
    %508 = vmatpush.msra.mxu0 0.0
    %509 = vmatpush.msra.mxu0 0.0
    %510 = vmatpush.msra.mxu0 0.0
    %511 = vmatpush.msra.mxu0 0.0
    %512 = vmatpush.msra.mxu0 0.0
    %513 = vmatpush.msra.mxu0 0.0
    %514 = vmatpush.msra.mxu0 0.0
    %515 = vmatpush.msra.mxu0 0.0
    %516 = vmatpush.msra.mxu0 %v161
    %517 = vmatpush.msra.mxu0 %v159
    %518 = vmatpush.msra.mxu0 %v157
    %519 = vmatpush.msra.mxu0 %v155
    %520 = vmatpush.msra.mxu0 %v153
    %521 = vmatpush.msra.mxu0 %v151
    %522 = vmatpush.msra.mxu0 %v149
    %523 = vmatpush.msra.mxu0 %v147
    %524 = vmatmul.f32.gmra.mxu0 %v486
    %v525 = vpop.f32.mrf.mxu0
    %v526 = vadd.f32 0.0, %v525
    %527 = vdwg.mxu0
    %v530 = vrot.slane %v506, 2
    %v531 = vrot.slane %v526, 2
    %v534 = vadd.f32 %v118, %v530
    %v535 = vadd.f32 %v141, %v531
    %v536 = vxor.u32 %v534, 2147483648
    %v537 = vxor.u32 %v535, 2147483648
    %v538 = vmul.f32 %v536, 1.442695
    %v539 = vpow.pop %v538
    %v540 = vmul.f32 %v537, 1.442695
    %v541 = vpow.pop %v540
    %v542 = vadd.f32 %v539, 1.0
    %v543 = vadd.f32 %v541, 1.0
    %v544 = vrcp.pop %v542
    %v545 = vmul.f32 %v542, %v544
    %v546 = vsub.f32 1.0, %v545
    %v547 = vmul.f32 %v544, %v546
    %v548 = vadd.f32 %v544, %v547
    %vm549 = vweird.f32 %v542
    %vm550 = vweird.f32 %v544
    %vm551 = vmor %vm549, %vm550
    %v552 = vsel %vm551, %v544, %v548
    %v553 = vand.u32 2147483647, %v542
    %vm554 = vcmp.eq.f32.partialorder %v553, 8.507059e+37
    %v555 = vand.u32 %v542, 2147483648
    %v556 = vor.u32 1.1754944e-38, %v555
    %v557 = vsel %vm554, %v556, %v552
    %v558 = vmul.f32 1.0, %v557
    %v559 = vrcp.pop %v543
    %v560 = vmul.f32 %v543, %v559
    %v561 = vsub.f32 1.0, %v560
    %v562 = vmul.f32 %v559, %v561
    %v563 = vadd.f32 %v559, %v562
    %vm564 = vweird.f32 %v543
    %vm565 = vweird.f32 %v559
    %vm566 = vmor %vm564, %vm565
    %v567 = vsel %vm566, %v559, %v563
    %v568 = vand.u32 2147483647, %v543
    %vm569 = vcmp.eq.f32.partialorder %v568, 8.507059e+37
    %v570 = vand.u32 %v543, 2147483648
    %v571 = vor.u32 1.1754944e-38, %v570
    %v572 = vsel %vm569, %v571, %v567
    %v573 = vmul.f32 1.0, %v572
    %v574 = vtanh.pop %v535
    %v576 = vrot.slane %v477, 6
    %v578 = vmul.f32 %v558, %v576
    %580 = vrot.lane.b32.xlu0 %v574, 64
    %v581 = vpop.permute.xlu0 %580
    %v583 = vmul.f32 %v558, %v581
    %585 = vrot.lane.b32.xlu0 %v583, 64
    %v586 = vpop.permute.xlu0 %585
    %v588 = vadd.f32 %v578, %v586
    %v589 = vtanh.pop %v588
    %591 = vrot.lane.b32.xlu0 %v589, 64
    %v592 = vpop.permute.xlu0 %591
    %v594 = vmul.f32 %v573, %v592
    %v596 = vrot.slane %v594, 6
    %v597 = vsel %vm93, %v596, 0
    %599 = vmatpush.msra.mxu0 0.0
    %600 = vmatpush.msra.mxu0 0.0
    %601 = vmatpush.msra.mxu0 0.0
    %602 = vmatpush.msra.mxu0 0.0
    %603 = vmatpush.msra.mxu0 0.0
    %604 = vmatpush.msra.mxu0 0.0
    %605 = vmatpush.msra.mxu0 0.0
    %606 = vmatpush.msra.mxu0 0.0
    %607 = vmatpush.msra.mxu0 %v160
    %608 = vmatpush.msra.mxu0 %v158
    %609 = vmatpush.msra.mxu0 %v156
    %610 = vmatpush.msra.mxu0 %v154
    %611 = vmatpush.msra.mxu0 %v152
    %612 = vmatpush.msra.mxu0 %v150
    %613 = vmatpush.msra.mxu0 %v148
    %614 = vmatpush.msra.mxu0 %v146
    %615 = vmatmul.f32.gmra.mxu0 %v597
    %v616 = vpop.f32.mrf.mxu0
    %v617 = vadd.f32 0.0, %v616
    %618 = vdwg.mxu0
    %619 = vmatpush.msra.mxu0 0.0
    %620 = vmatpush.msra.mxu0 0.0
    %621 = vmatpush.msra.mxu0 0.0
    %622 = vmatpush.msra.mxu0 0.0
    %623 = vmatpush.msra.mxu0 0.0
    %624 = vmatpush.msra.mxu0 0.0
    %625 = vmatpush.msra.mxu0 0.0
    %626 = vmatpush.msra.mxu0 0.0
    %627 = vmatpush.msra.mxu0 %v161
    %628 = vmatpush.msra.mxu0 %v159
    %629 = vmatpush.msra.mxu0 %v157
    %630 = vmatpush.msra.mxu0 %v155
    %631 = vmatpush.msra.mxu0 %v153
    %632 = vmatpush.msra.mxu0 %v151
    %633 = vmatpush.msra.mxu0 %v149
    %634 = vmatpush.msra.mxu0 %v147
    %635 = vmatmul.f32.gmra.mxu0 %v597
    %v636 = vpop.f32.mrf.mxu0
    %v637 = vadd.f32 0.0, %v636
    %638 = vdwg.mxu0
    %v639 = vadd.f32 %v121, %v617
    %v640 = vadd.f32 %v144, %v637
    %v641 = vxor.u32 %v639, 2147483648
    %v642 = vxor.u32 %v640, 2147483648
    %v643 = vmul.f32 %v641, 1.442695
    %v644 = vpow.pop %v643
    %v645 = vmul.f32 %v642, 1.442695
    %v646 = vpow.pop %v645
    %v647 = vadd.f32 %v644, 1.0
    %v648 = vadd.f32 %v646, 1.0
    %v649 = vrcp.pop %v647
    %v650 = vmul.f32 %v647, %v649
    %v651 = vsub.f32 1.0, %v650
    %v652 = vmul.f32 %v649, %v651
    %v653 = vadd.f32 %v649, %v652
    %vm654 = vweird.f32 %v647
    %vm655 = vweird.f32 %v649
    %vm656 = vmor %vm654, %vm655
    %v657 = vsel %vm656, %v649, %v653
    %v658 = vand.u32 2147483647, %v647
    %vm659 = vcmp.eq.f32.partialorder %v658, 8.507059e+37
    %v660 = vand.u32 %v647, 2147483648
    %v661 = vor.u32 1.1754944e-38, %v660
    %v662 = vsel %vm659, %v661, %v657
    %v663 = vmul.f32 1.0, %v662
    %v664 = vrcp.pop %v648
    %v665 = vmul.f32 %v648, %v664
    %v666 = vsub.f32 1.0, %v665
    %v667 = vmul.f32 %v664, %v666
    %v668 = vadd.f32 %v664, %v667
    %vm669 = vweird.f32 %v648
    %vm670 = vweird.f32 %v664
    %vm671 = vmor %vm669, %vm670
    %v672 = vsel %vm671, %v664, %v668
    %v673 = vand.u32 2147483647, %v648
    %vm674 = vcmp.eq.f32.partialorder %v673, 8.507059e+37
    %v675 = vand.u32 %v648, 2147483648
    %v676 = vor.u32 1.1754944e-38, %v675
    %v677 = vsel %vm674, %v676, %v672
    %v678 = vmul.f32 1.0, %v677
    %v679 = vtanh.pop %v640
    %v681 = vrot.slane %v588, 6
    %v683 = vmul.f32 %v663, %v681
    %685 = vrot.lane.b32.xlu0 %v679, 64
    %v686 = vpop.permute.xlu0 %685
    %v688 = vmul.f32 %v663, %v686
    %690 = vrot.lane.b32.xlu0 %v688, 64
    %v691 = vpop.permute.xlu0 %690
    %v693 = vadd.f32 %v683, %v691
    %v694 = vtanh.pop %v693
    %696 = vrot.lane.b32.xlu0 %v694, 64
    %v697 = vpop.permute.xlu0 %696
    %v699 = vmul.f32 %v678, %v697
    %v701 = vsel %vm93, %v699, 0
    %703 = vmatpush.msra.mxu0 0.0
    %704 = vmatpush.msra.mxu0 0.0
    %705 = vmatpush.msra.mxu0 0.0
    %706 = vmatpush.msra.mxu0 0.0
    %707 = vmatpush.msra.mxu0 0.0
    %708 = vmatpush.msra.mxu0 0.0
    %709 = vmatpush.msra.mxu0 0.0
    %710 = vmatpush.msra.mxu0 0.0
    %711 = vmatpush.msra.mxu0 %v160
    %712 = vmatpush.msra.mxu0 %v158
    %713 = vmatpush.msra.mxu0 %v156
    %714 = vmatpush.msra.mxu0 %v154
    %715 = vmatpush.msra.mxu0 %v152
    %716 = vmatpush.msra.mxu0 %v150
    %717 = vmatpush.msra.mxu0 %v148
    %718 = vmatpush.msra.mxu0 %v146
    %719 = vmatmul.f32.gmra.mxu0 %v701
    %v720 = vpop.f32.mrf.mxu0
    %v721 = vadd.f32 0.0, %v720
    %722 = vdwg.mxu0
    %723 = vmatpush.msra.mxu0 0.0
    %724 = vmatpush.msra.mxu0 0.0
    %725 = vmatpush.msra.mxu0 0.0
    %726 = vmatpush.msra.mxu0 0.0
    %727 = vmatpush.msra.mxu0 0.0
    %728 = vmatpush.msra.mxu0 0.0
    %729 = vmatpush.msra.mxu0 0.0
    %730 = vmatpush.msra.mxu0 0.0
    %731 = vmatpush.msra.mxu0 %v161
    %732 = vmatpush.msra.mxu0 %v159
    %733 = vmatpush.msra.mxu0 %v157
    %734 = vmatpush.msra.mxu0 %v155
    %735 = vmatpush.msra.mxu0 %v153
    %736 = vmatpush.msra.mxu0 %v151
    %737 = vmatpush.msra.mxu0 %v149
    %738 = vmatpush.msra.mxu0 %v147
    %739 = vmatmul.f32.gmra.mxu0 %v701
    %v740 = vpop.f32.mrf.mxu0
    %v741 = vadd.f32 0.0, %v740
    %742 = vdwg.mxu0
    %v745 = vrot.slane %v721, 6
    %v746 = vrot.slane %v741, 6
    %v749 = vadd.f32 %v121, %v745
    %v750 = vadd.f32 %v144, %v746
    %v751 = vxor.u32 %v749, 2147483648
    %v752 = vxor.u32 %v750, 2147483648
    %v753 = vmul.f32 %v751, 1.442695
    %v754 = vpow.pop %v753
    %v755 = vmul.f32 %v752, 1.442695
    %v756 = vpow.pop %v755
    %v757 = vadd.f32 %v754, 1.0
    %v758 = vadd.f32 %v756, 1.0
    %v759 = vrcp.pop %v757
    %v760 = vmul.f32 %v757, %v759
    %v761 = vsub.f32 1.0, %v760
    %v762 = vmul.f32 %v759, %v761
    %v763 = vadd.f32 %v759, %v762
    %vm764 = vweird.f32 %v757
    %vm765 = vweird.f32 %v759
    %vm766 = vmor %vm764, %vm765
    %v767 = vsel %vm766, %v759, %v763
    %v768 = vand.u32 2147483647, %v757
    %vm769 = vcmp.eq.f32.partialorder %v768, 8.507059e+37
    %v770 = vand.u32 %v757, 2147483648
    %v771 = vor.u32 1.1754944e-38, %v770
    %v772 = vsel %vm769, %v771, %v767
    %v773 = vmul.f32 1.0, %v772
    %v774 = vrcp.pop %v758
    %v775 = vmul.f32 %v758, %v774
    %v776 = vsub.f32 1.0, %v775
    %v777 = vmul.f32 %v774, %v776
    %v778 = vadd.f32 %v774, %v777
    %vm779 = vweird.f32 %v758
    %vm780 = vweird.f32 %v774
    %vm781 = vmor %vm779, %vm780
    %v782 = vsel %vm781, %v774, %v778
    %v783 = vand.u32 2147483647, %v758
    %vm784 = vcmp.eq.f32.partialorder %v783, 8.507059e+37
    %v785 = vand.u32 %v758, 2147483648
    %v786 = vor.u32 1.1754944e-38, %v785
    %v787 = vsel %vm784, %v786, %v782
    %v788 = vmul.f32 1.0, %v787
    %v789 = vtanh.pop %v750
    %v791 = vrot.slane %v693, 6
    %v793 = vmul.f32 %v773, %v791
    %795 = vrot.lane.b32.xlu0 %v789, 64
    %v796 = vpop.permute.xlu0 %795
    %v798 = vmul.f32 %v773, %v796
    %800 = vrot.lane.b32.xlu0 %v798, 64
    %v801 = vpop.permute.xlu0 %800
    %v803 = vadd.f32 %v793, %v801
    %v804 = vtanh.pop %v803
    %806 = vrot.lane.b32.xlu0 %v804, 64
    %v807 = vpop.permute.xlu0 %806
    %v809 = vmul.f32 %v788, %v807
    %v811 = vrot.slane %v809, 2
    %v812 = vsel %vm93, %v811, 0
    %814 = vmatpush.msra.mxu0 0.0
    %815 = vmatpush.msra.mxu0 0.0
    %816 = vmatpush.msra.mxu0 0.0
    %817 = vmatpush.msra.mxu0 0.0
    %818 = vmatpush.msra.mxu0 0.0
    %819 = vmatpush.msra.mxu0 0.0
    %820 = vmatpush.msra.mxu0 0.0
    %821 = vmatpush.msra.mxu0 0.0
    %822 = vmatpush.msra.mxu0 %v160
    %823 = vmatpush.msra.mxu0 %v158
    %824 = vmatpush.msra.mxu0 %v156
    %825 = vmatpush.msra.mxu0 %v154
    %826 = vmatpush.msra.mxu0 %v152
    %827 = vmatpush.msra.mxu0 %v150
    %828 = vmatpush.msra.mxu0 %v148
    %829 = vmatpush.msra.mxu0 %v146
    %830 = vmatmul.f32.gmra.mxu0 %v812
    %v831 = vpop.f32.mrf.mxu0
    %v832 = vadd.f32 0.0, %v831
    %833 = vdwg.mxu0
    %834 = vmatpush.msra.mxu0 0.0
    %835 = vmatpush.msra.mxu0 0.0
    %836 = vmatpush.msra.mxu0 0.0
    %837 = vmatpush.msra.mxu0 0.0
    %838 = vmatpush.msra.mxu0 0.0
    %839 = vmatpush.msra.mxu0 0.0
    %840 = vmatpush.msra.mxu0 0.0
    %841 = vmatpush.msra.mxu0 0.0
    %842 = vmatpush.msra.mxu0 %v161
    %843 = vmatpush.msra.mxu0 %v159
    %844 = vmatpush.msra.mxu0 %v157
    %845 = vmatpush.msra.mxu0 %v155
    %846 = vmatpush.msra.mxu0 %v153
    %847 = vmatpush.msra.mxu0 %v151
    %848 = vmatpush.msra.mxu0 %v149
    %849 = vmatpush.msra.mxu0 %v147
    %850 = vmatmul.f32.gmra.mxu0 %v812
    %v851 = vpop.f32.mrf.mxu0
    %v852 = vadd.f32 0.0, %v851
    %853 = vdwg.mxu0
    %v856 = vrot.slane %v832, 4
    %v857 = vrot.slane %v852, 4
    %v860 = vadd.f32 %v121, %v856
    %v861 = vadd.f32 %v144, %v857
    %v862 = vxor.u32 %v860, 2147483648
    %v863 = vxor.u32 %v861, 2147483648
    %v864 = vmul.f32 %v862, 1.442695
    %v865 = vpow.pop %v864
    %v866 = vmul.f32 %v863, 1.442695
    %v867 = vpow.pop %v866
    %v868 = vadd.f32 %v865, 1.0
    %v869 = vadd.f32 %v867, 1.0
    %v870 = vrcp.pop %v868
    %v871 = vmul.f32 %v868, %v870
    %v872 = vsub.f32 1.0, %v871
    %v873 = vmul.f32 %v870, %v872
    %v874 = vadd.f32 %v870, %v873
    %vm875 = vweird.f32 %v868
    %vm876 = vweird.f32 %v870
    %vm877 = vmor %vm875, %vm876
    %v878 = vsel %vm877, %v870, %v874
    %v879 = vand.u32 2147483647, %v868
    %vm880 = vcmp.eq.f32.partialorder %v879, 8.507059e+37
    %v881 = vand.u32 %v868, 2147483648
    %v882 = vor.u32 1.1754944e-38, %v881
    %v883 = vsel %vm880, %v882, %v878
    %v884 = vmul.f32 1.0, %v883
    %v885 = vrcp.pop %v869
    %v886 = vmul.f32 %v869, %v885
    %v887 = vsub.f32 1.0, %v886
    %v888 = vmul.f32 %v885, %v887
    %v889 = vadd.f32 %v885, %v888
    %vm890 = vweird.f32 %v869
    %vm891 = vweird.f32 %v885
    %vm892 = vmor %vm890, %vm891
    %v893 = vsel %vm892, %v885, %v889
    %v894 = vand.u32 2147483647, %v869
    %vm895 = vcmp.eq.f32.partialorder %v894, 8.507059e+37
    %v896 = vand.u32 %v869, 2147483648
    %v897 = vor.u32 1.1754944e-38, %v896
    %v898 = vsel %vm895, %v897, %v893
    %v899 = vmul.f32 1.0, %v898
    %v900 = vtanh.pop %v861
    %v902 = vrot.slane %v803, 6
    %v904 = vmul.f32 %v884, %v902
    %906 = vrot.lane.b32.xlu0 %v900, 64
    %v907 = vpop.permute.xlu0 %906
    %v909 = vmul.f32 %v884, %v907
    %911 = vrot.lane.b32.xlu0 %v909, 64
    %v912 = vpop.permute.xlu0 %911
    %v914 = vadd.f32 %v904, %v912
    %v915 = vtanh.pop %v914
    %917 = vrot.lane.b32.xlu0 %v915, 64
    %v918 = vpop.permute.xlu0 %917
    %v920 = vmul.f32 %v899, %v918
    %v922 = vrot.slane %v920, 4
    %v923 = vsel %vm93, %v922, 0
    %925 = vmatpush.msra.mxu0 0.0
    %926 = vmatpush.msra.mxu0 0.0
    %927 = vmatpush.msra.mxu0 0.0
    %928 = vmatpush.msra.mxu0 0.0
    %929 = vmatpush.msra.mxu0 0.0
    %930 = vmatpush.msra.mxu0 0.0
    %931 = vmatpush.msra.mxu0 0.0
    %932 = vmatpush.msra.mxu0 0.0
    %933 = vmatpush.msra.mxu0 %v160
    %934 = vmatpush.msra.mxu0 %v158
    %935 = vmatpush.msra.mxu0 %v156
    %936 = vmatpush.msra.mxu0 %v154
    %937 = vmatpush.msra.mxu0 %v152
    %938 = vmatpush.msra.mxu0 %v150
    %939 = vmatpush.msra.mxu0 %v148
    %940 = vmatpush.msra.mxu0 %v146
    %941 = vmatmul.f32.gmra.mxu0 %v923
    %v942 = vpop.f32.mrf.mxu0
    %v943 = vadd.f32 0.0, %v942
    %944 = vdwg.mxu0
    %945 = vmatpush.msra.mxu0 0.0
    %946 = vmatpush.msra.mxu0 0.0
    %947 = vmatpush.msra.mxu0 0.0
    %948 = vmatpush.msra.mxu0 0.0
    %949 = vmatpush.msra.mxu0 0.0
    %950 = vmatpush.msra.mxu0 0.0
    %951 = vmatpush.msra.mxu0 0.0
    %952 = vmatpush.msra.mxu0 0.0
    %953 = vmatpush.msra.mxu0 %v161
    %954 = vmatpush.msra.mxu0 %v159
    %955 = vmatpush.msra.mxu0 %v157
    %956 = vmatpush.msra.mxu0 %v155
    %957 = vmatpush.msra.mxu0 %v153
    %958 = vmatpush.msra.mxu0 %v151
    %959 = vmatpush.msra.mxu0 %v149
    %960 = vmatpush.msra.mxu0 %v147
    %961 = vmatmul.f32.gmra.mxu0 %v923
    %v962 = vpop.f32.mrf.mxu0
    %v963 = vadd.f32 0.0, %v962
    %964 = vdwg.mxu0
    %v967 = vrot.slane %v943, 2
    %v968 = vrot.slane %v963, 2
    %v971 = vadd.f32 %v121, %v967
    %v972 = vadd.f32 %v144, %v968
    %v973 = vxor.u32 %v971, 2147483648
    %v974 = vxor.u32 %v972, 2147483648
    %v975 = vmul.f32 %v973, 1.442695
    %v976 = vpow.pop %v975
    %v977 = vmul.f32 %v974, 1.442695
    %v978 = vpow.pop %v977
    %v979 = vadd.f32 %v976, 1.0
    %v980 = vadd.f32 %v978, 1.0
    %v981 = vrcp.pop %v979
    %v982 = vmul.f32 %v979, %v981
    %v983 = vsub.f32 1.0, %v982
    %v984 = vmul.f32 %v981, %v983
    %v985 = vadd.f32 %v981, %v984
    %vm986 = vweird.f32 %v979
    %vm987 = vweird.f32 %v981
    %vm988 = vmor %vm986, %vm987
    %v989 = vsel %vm988, %v981, %v985
    %v990 = vand.u32 2147483647, %v979
    %vm991 = vcmp.eq.f32.partialorder %v990, 8.507059e+37
    %v992 = vand.u32 %v979, 2147483648
    %v993 = vor.u32 1.1754944e-38, %v992
    %v994 = vsel %vm991, %v993, %v989
    %v995 = vmul.f32 1.0, %v994
    %v996 = vrcp.pop %v980
    %v997 = vmul.f32 %v980, %v996
    %v998 = vsub.f32 1.0, %v997
    %v999 = vmul.f32 %v996, %v998
    %v1000 = vadd.f32 %v996, %v999
    %vm1001 = vweird.f32 %v980
    %vm1002 = vweird.f32 %v996
    %vm1003 = vmor %vm1001, %vm1002
    %v1004 = vsel %vm1003, %v996, %v1000
    %v1005 = vand.u32 2147483647, %v980
    %vm1006 = vcmp.eq.f32.partialorder %v1005, 8.507059e+37
    %v1007 = vand.u32 %v980, 2147483648
    %v1008 = vor.u32 1.1754944e-38, %v1007
    %v1009 = vsel %vm1006, %v1008, %v1004
    %v1010 = vmul.f32 1.0, %v1009
    %v1011 = vtanh.pop %v972
    %v1013 = vrot.slane %v914, 6
    %v1015 = vmul.f32 %v995, %v1013
    %1017 = vrot.lane.b32.xlu0 %v1011, 64
    %v1018 = vpop.permute.xlu0 %1017
    %v1020 = vmul.f32 %v995, %v1018
    %1022 = vrot.lane.b32.xlu0 %v1020, 64
    %v1023 = vpop.permute.xlu0 %1022
    %v1025 = vadd.f32 %v1015, %v1023
    %v1026 = vtanh.pop %v1025
    %1028 = vrot.lane.b32.xlu0 %v1026, 64
    %v1029 = vpop.permute.xlu0 %1028
    %v1031 = vmul.f32 %v1010, %v1029
    %v1033 = vrot.slane %v1031, 6
    %v1036 = vrot.slane %v1025, 4
    %1037 = vrot.lane.b32.xlu0 %v1036, 64
    %v1038 = vpop.permute.xlu0 %1037
    %vm1040 = vcmask 1041408
    %v1041 = vsel %vm1040, %v1033, %v1038
    %v1042 = vld [vmem:[%s4] sm:$0xff]
    %v1043 = vld [vmem:[%s4 + $0x8] sm:$0xff]
    %v1044 = vld [vmem:[%s4 + $0x10] sm:$0xff]
    %v1045 = vld [vmem:[%s4 + $0x18] sm:$0xff]
    %v1046 = vld [vmem:[%s4 + $0x20] sm:$0xff]
    %v1047 = vld [vmem:[%s4 + $0x28] sm:$0xff]
    %v1048 = vld [vmem:[%s4 + $0x30] sm:$0xff]
    %v1049 = vld [vmem:[%s4 + $0x38] sm:$0xff]
    %v1050 = vld [vmem:[%s5] sm:$0x1]
    %v1052 = vperm.slane %v1050, 0
    %v1055 = vsel %vm93, %v1041, 0
    %1057 = vmatpush.msra.mxu0 0.0
    %1058 = vmatpush.msra.mxu0 0.0
    %1059 = vmatpush.msra.mxu0 0.0
    %1060 = vmatpush.msra.mxu0 0.0
    %1061 = vmatpush.msra.mxu0 0.0
    %1062 = vmatpush.msra.mxu0 0.0
    %1063 = vmatpush.msra.mxu0 0.0
    %1064 = vmatpush.msra.mxu0 0.0
    %1065 = vmatpush.msra.mxu0 %v1049
    %1066 = vmatpush.msra.mxu0 %v1048
    %1067 = vmatpush.msra.mxu0 %v1047
    %1068 = vmatpush.msra.mxu0 %v1046
    %1069 = vmatpush.msra.mxu0 %v1045
    %1070 = vmatpush.msra.mxu0 %v1044
    %1071 = vmatpush.msra.mxu0 %v1043
    %1072 = vmatpush.msra.mxu0 %v1042
    %1073 = vmatmul.f32.gmra.mxu0 %v1055
    %v1074 = vpop.f32.mrf.mxu0
    %v1075 = vadd.f32 %v1052, %v1074
    %1076 = vdwg.mxu0
    %v1077 = vtanh.pop %v1075
    %v1078 = vld [vmem:[%s6] sm:$0xff]
    %v1079 = vld [vmem:[%s6 + $0x8] sm:$0xff]
    %v1080 = vld [vmem:[%s6 + $0x10] sm:$0xff]
    %v1081 = vld [vmem:[%s6 + $0x18] sm:$0xff]
    %v1083 = vrot.slane %v1077, 2
    %vm1084 = vcmask 261120
    %v1085 = vsel %vm1084, %v1083, 0
    %1087 = vmatpush.msra.mxu0 0.0
    %1088 = vmatpush.msra.mxu0 0.0
    %1089 = vmatpush.msra.mxu0 0.0
    %1090 = vmatpush.msra.mxu0 0.0
    %1091 = vmatpush.msra.mxu0 0.0
    %1092 = vmatpush.msra.mxu0 0.0
    %1093 = vmatpush.msra.mxu0 0.0
    %1094 = vmatpush.msra.mxu0 0.0
    %1095 = vmatpush.msra.mxu0 0.0
    %1096 = vmatpush.msra.mxu0 0.0
    %1097 = vmatpush.msra.mxu0 0.0
    %1098 = vmatpush.msra.mxu0 0.0
    %1099 = vmatpush.msra.mxu0 %v1081
    %1100 = vmatpush.msra.mxu0 %v1080
    %1101 = vmatpush.msra.mxu0 %v1079
    %1102 = vmatpush.msra.mxu0 %v1078
    %1103 = vmatmul.f32.gmra.mxu0 %v1085
    %v1104 = vpop.f32.mrf.mxu0
    %v1105 = vadd.f32 0.0, %v1104
    %1106 = vdwg.mxu0
    %v1107 = vmul.f32 %v262, %v1105
    %v1109 = vrot.slane %v1105, 2
    %v1111 = vmul.f32 %v1031, %v1109
    %v1113 = vrot.slane %v1111, 6
    %1114 = vrot.lane.b32.xlu0 %v1113, 96
    %v1115 = vpop.permute.xlu0 %1114
    %v1117 = vadd.f32 %v1107, %v1115
    %vm1118 = vcmask 254976
    %v1119 = vsel %vm1118, %v1117, 0.0
    %1120 = vadd.xlane.f32.xlu0 %v1119
    %v1121 = vpop.xlane.xlu0 %1120
    %v1122 = vrot.slane %v1105, 6
    %v1124 = vmul.f32 %v372, %v1122
    %v1125 = vrot.slane %v1105, 4
    %v1127 = vmul.f32 %v920, %v1125
    %v1129 = vrot.slane %v1127, 2
    %1130 = vrot.lane.b32.xlu0 %v1129, 96
    %v1131 = vpop.permute.xlu0 %1130
    %v1133 = vadd.f32 %v1124, %v1131
    %vm1134 = vcmask 257026
    %v1135 = vsel %vm1134, %v1133, 0.0
    %1136 = vadd.xlane.f32.xlu0 %v1135
    %v1137 = vpop.xlane.xlu0 %1136
    %v1138 = vmul.f32 %v483, %v1125
    %v1139 = vmul.f32 %v809, %v1122
    %v1141 = vrot.slane %v1139, 6
    %1142 = vrot.lane.b32.xlu0 %v1141, 96
    %v1143 = vpop.permute.xlu0 %1142
    %v1145 = vadd.f32 %v1138, %v1143
    %vm1146 = vcmask 259076
    %v1147 = vsel %vm1146, %v1145, 0.0
    %1148 = vadd.xlane.f32.xlu0 %v1147
    %v1149 = vpop.xlane.xlu0 %1148
    %v1150 = vmul.f32 %v594, %v1109
    %v1151 = vmul.f32 %v699, %v1105
    %v1153 = vrot.slane %v1151, 2
    %1154 = vrot.lane.b32.xlu0 %v1153, 96
    %v1155 = vpop.permute.xlu0 %1154
    %v1157 = vadd.f32 %v1150, %v1155
    %vm1158 = vcmask 261126
    %v1159 = vsel %vm1158, %v1157, 0.0
    %1160 = vadd.xlane.f32.xlu0 %v1159
    %v1161 = vpop.xlane.xlu0 %1160
    %v1163 = vrot.slane %v1150, 6
    %1164 = vrot.lane.b32.xlu0 %v1163, 96
    %v1165 = vpop.permute.xlu0 %1164
    %v1167 = vadd.f32 %v1151, %v1165
    %v1168 = vsel %vm1118, %v1167, 0.0
    %1169 = vadd.xlane.f32.xlu0 %v1168
    %v1170 = vpop.xlane.xlu0 %1169
    %v1172 = vrot.slane %v1138, 2
    %1173 = vrot.lane.b32.xlu0 %v1172, 96
    %v1174 = vpop.permute.xlu0 %1173
    %v1176 = vadd.f32 %v1139, %v1174
    %v1177 = vsel %vm1134, %v1176, 0.0
    %1178 = vadd.xlane.f32.xlu0 %v1177
    %v1179 = vpop.xlane.xlu0 %1178
    %v1181 = vrot.slane %v1124, 6
    %1182 = vrot.lane.b32.xlu0 %v1181, 96
    %v1183 = vpop.permute.xlu0 %1182
    %v1185 = vadd.f32 %v1127, %v1183
    %v1186 = vsel %vm1146, %v1185, 0.0
    %1187 = vadd.xlane.f32.xlu0 %v1186
    %v1188 = vpop.xlane.xlu0 %1187
    %v1190 = vrot.slane %v1107, 2
    %1191 = vrot.lane.b32.xlu0 %v1190, 96
    %v1192 = vpop.permute.xlu0 %1191
    %v1194 = vadd.f32 %v1111, %v1192
    %v1195 = vsel %vm1158, %v1194, 0.0
    %1196 = vadd.xlane.f32.xlu0 %v1195
    %v1197 = vpop.xlane.xlu0 %1196
    %v1199 = vrot.slane %v1137, 2
    %v1202 = vrot.slane %v1149, 4
    %v1205 = vrot.slane %v1161, 6
    %v1208 = vrot.slane %v1179, 2
    %v1211 = vrot.slane %v1188, 4
    %v1214 = vrot.slane %v1197, 6
    %vm1216 = vcmask 7168
    %v1217 = vsel %vm1216, %v1121, %v1199
    %vm1218 = vcmask 15360
    %v1219 = vsel %vm1218, %v1217, %v1202
    %vm1220 = vcmask 23552
    %v1221 = vsel %vm1220, %v1219, %v1205
    %vm1222 = vcmask 31744
    %v1223 = vsel %vm1222, %v1221, %v1170
    %vm1224 = vcmask 39936
    %v1225 = vsel %vm1224, %v1223, %v1208
    %vm1226 = vcmask 48128
    %v1227 = vsel %vm1226, %v1225, %v1211
    %vm1228 = vcmask 56320
    %v1229 = vsel %vm1228, %v1227, %v1214
    %vm1230 = vcmask 58368
    %v1231 = vsel %vm1230, %v1229, -inf
    %1232 = vmax.xlane.f32.xlu0 %v1231
    %v1233 = vpop.xlane.xlu0 %1232
    %v1234 = vsub.f32 %v1229, %v1233
    %v1235 = vmul.f32 %v1234, 1.442695
    %v1236 = vpow.pop %v1235
    %v1237 = vsel %vm1230, %v1236, 0.0
    %1238 = vadd.xlane.f32.xlu0 %v1237
    %v1239 = vpop.xlane.xlu0 %1238
    %v1240 = vrcp.pop %v1239
    %v1241 = vmul.f32 %v1239, %v1240
    %v1242 = vsub.f32 1.0, %v1241
    %v1243 = vmul.f32 %v1240, %v1242
    %v1244 = vadd.f32 %v1240, %v1243
    %vm1245 = vweird.f32 %v1239
    %vm1246 = vweird.f32 %v1240
    %vm1247 = vmor %vm1245, %vm1246
    %v1248 = vsel %vm1247, %v1240, %v1244
    %v1249 = vand.u32 2147483647, %v1239
    %vm1250 = vcmp.eq.f32.partialorder %v1249, 8.507059e+37
    %v1251 = vand.u32 %v1239, 2147483648
    %v1252 = vor.u32 1.1754944e-38, %v1251
    %v1253 = vsel %vm1250, %v1252, %v1248
    %v1254 = vmul.f32 %v1236, %v1253
    %1256 = vset.pattern.permute.xlu0 0
    %1257 = vperm.xlu0 %1256, %v1254
    %v1258 = vpop.permute.xlu0 %1257
    %v1260 = vmul.f32 %v1258, %v262
    %v1261 = vadd.f32 %v1260, 0.0
    %1262 = vrot.lane.b32.xlu0 %v1033, 96
    %v1263 = vpop.permute.xlu0 %1262
    %v1265 = vmul.f32 %v1258, %v1263
    %v1266 = vadd.f32 %v1265, 0.0
    %1267 = vset.pattern.permute.xlu0 1
    %1268 = vperm.xlu0 %1267, %v1254
    %v1269 = vpop.permute.xlu0 %1268
    %v1272 = vmul.f32 %v1269, %v374
    %v1273 = vadd.f32 %v1261, %v1272
    %1274 = vrot.lane.b32.xlu0 %v922, 96
    %v1275 = vpop.permute.xlu0 %1274
    %v1277 = vmul.f32 %v1269, %v1275
    %v1278 = vadd.f32 %v1266, %v1277
    %1279 = vset.pattern.permute.xlu0 2
    %1280 = vperm.xlu0 %1279, %v1254
    %v1281 = vpop.permute.xlu0 %1280
    %v1284 = vmul.f32 %v1281, %v485
    %v1285 = vadd.f32 %v1273, %v1284
    %1286 = vrot.lane.b32.xlu0 %v811, 96
    %v1287 = vpop.permute.xlu0 %1286
    %v1289 = vmul.f32 %v1281, %v1287
    %v1290 = vadd.f32 %v1278, %v1289
    %1291 = vset.pattern.permute.xlu0 3
    %1292 = vperm.xlu0 %1291, %v1254
    %v1293 = vpop.permute.xlu0 %1292
    %v1296 = vmul.f32 %v1293, %v596
    %v1297 = vadd.f32 %v1285, %v1296
    %v1298 = vmul.f32 %v1293, %v699
    %1300 = vrot.lane.b32.xlu0 %v1298, 96
    %v1301 = vpop.permute.xlu0 %1300
    %v1303 = vadd.f32 %v1290, %v1301
    %1304 = vset.pattern.permute.xlu0 4
    %1305 = vperm.xlu0 %1304, %v1254
    %v1306 = vpop.permute.xlu0 %1305
    %v1308 = vmul.f32 %v1306, %v699
    %v1309 = vadd.f32 %v1297, %v1308
    %1310 = vrot.lane.b32.xlu0 %v596, 96
    %v1311 = vpop.permute.xlu0 %1310
    %v1313 = vmul.f32 %v1306, %v1311
    %v1314 = vadd.f32 %v1303, %v1313
    %1315 = vset.pattern.permute.xlu0 5
    %1316 = vperm.xlu0 %1315, %v1254
    %v1317 = vpop.permute.xlu0 %1316
    %v1320 = vmul.f32 %v1317, %v811
    %v1321 = vadd.f32 %v1309, %v1320
    %1322 = vrot.lane.b32.xlu0 %v485, 96
    %v1323 = vpop.permute.xlu0 %1322
    %v1325 = vmul.f32 %v1317, %v1323
    %v1326 = vadd.f32 %v1314, %v1325
    %1327 = vset.pattern.permute.xlu0 6
    %1328 = vperm.xlu0 %1327, %v1254
    %v1329 = vpop.permute.xlu0 %1328
    %v1332 = vmul.f32 %v1329, %v922
    %v1333 = vadd.f32 %v1321, %v1332
    %1334 = vrot.lane.b32.xlu0 %v374, 96
    %v1335 = vpop.permute.xlu0 %1334
    %v1337 = vmul.f32 %v1329, %v1335
    %v1338 = vadd.f32 %v1326, %v1337
    %1339 = vset.pattern.permute.xlu0 7
    %1340 = vperm.xlu0 %1339, %v1254
    %v1341 = vpop.permute.xlu0 %1340
    %v1343 = vmul.f32 %v1341, %v1033
    %v1344 = vadd.f32 %v1333, %v1343
    %v1345 = vmul.f32 %v1341, %v262
    %1347 = vrot.lane.b32.xlu0 %v1345, 96
    %v1348 = vpop.permute.xlu0 %1347
    %v1350 = vadd.f32 %v1338, %v1348
    %v1351 = vld [vmem:[%s7] sm:$0xff]
    %v1352 = vld [vmem:[%s7 + $0x8] sm:$0xff]
    %v1353 = vld [vmem:[%s7 + $0x10] sm:$0xff]
    %v1354 = vld [vmem:[%s7 + $0x18] sm:$0xff]
    %v1355 = vld [vmem:[%s8] sm:$0xff]
    %v1356 = vld [vmem:[%s8 + $0x8] sm:$0xff]
    %v1357 = vld [vmem:[%s8 + $0x10] sm:$0xff]
    %v1358 = vld [vmem:[%s8 + $0x18] sm:$0xff]
    %v1360 = vsel %vm1084, %v1350, 0
    %1362 = vmatpush.msra.mxu0 0.0
    %1363 = vmatpush.msra.mxu0 0.0
    %1364 = vmatpush.msra.mxu0 0.0
    %1365 = vmatpush.msra.mxu0 0.0
    %1366 = vmatpush.msra.mxu0 0.0
    %1367 = vmatpush.msra.mxu0 0.0
    %1368 = vmatpush.msra.mxu0 0.0
    %1369 = vmatpush.msra.mxu0 0.0
    %1370 = vmatpush.msra.mxu0 0.0
    %1371 = vmatpush.msra.mxu0 0.0
    %1372 = vmatpush.msra.mxu0 0.0
    %1373 = vmatpush.msra.mxu0 0.0
    %1374 = vmatpush.msra.mxu0 %v1358
    %1375 = vmatpush.msra.mxu0 %v1357
    %1376 = vmatpush.msra.mxu0 %v1356
    %1377 = vmatpush.msra.mxu0 %v1355
    %1378 = vmatmul.f32.gmra.mxu0 %v1360
    %v1379 = vpop.f32.mrf.mxu0
    %v1380 = vadd.f32 0.0, %v1379
    %1381 = vdwg.mxu0
    %v1383 = vsel %vm1084, %v1344, 0
    %1385 = vmatpush.msra.mxu0 0.0
    %1386 = vmatpush.msra.mxu0 0.0
    %1387 = vmatpush.msra.mxu0 0.0
    %1388 = vmatpush.msra.mxu0 0.0
    %1389 = vmatpush.msra.mxu0 0.0
    %1390 = vmatpush.msra.mxu0 0.0
    %1391 = vmatpush.msra.mxu0 0.0
    %1392 = vmatpush.msra.mxu0 0.0
    %1393 = vmatpush.msra.mxu0 0.0
    %1394 = vmatpush.msra.mxu0 0.0
    %1395 = vmatpush.msra.mxu0 0.0
    %1396 = vmatpush.msra.mxu0 0.0
    %1397 = vmatpush.msra.mxu0 %v1354
    %1398 = vmatpush.msra.mxu0 %v1353
    %1399 = vmatpush.msra.mxu0 %v1352
    %1400 = vmatpush.msra.mxu0 %v1351
    %1401 = vmatmul.f32.gmra.mxu0 %v1383
    %v1402 = vpop.f32.mrf.mxu0
    %v1403 = vadd.f32 %v1380, %v1402
    %1404 = vdwg.mxu0
    %v1405 = vld [vmem:[%s9] sm:$0xff]
    %v1406 = vld [vmem:[%s9 + $0x8] sm:$0xff]
    %v1407 = vld [vmem:[%s9 + $0x10] sm:$0xff]
    %v1408 = vld [vmem:[%s9 + $0x18] sm:$0xff]
    %1409 = vmatpush.msra.mxu0 0.0
    %1410 = vmatpush.msra.mxu0 0.0
    %1411 = vmatpush.msra.mxu0 0.0
    %1412 = vmatpush.msra.mxu0 0.0
    %1413 = vmatpush.msra.mxu0 0.0
    %1414 = vmatpush.msra.mxu0 0.0
    %1415 = vmatpush.msra.mxu0 0.0
    %1416 = vmatpush.msra.mxu0 0.0
    %1417 = vmatpush.msra.mxu0 0.0
    %1418 = vmatpush.msra.mxu0 0.0
    %1419 = vmatpush.msra.mxu0 0.0
    %1420 = vmatpush.msra.mxu0 0.0
    %1421 = vmatpush.msra.mxu0 %v1408
    %1422 = vmatpush.msra.mxu0 %v1407
    %1423 = vmatpush.msra.mxu0 %v1406
    %1424 = vmatpush.msra.mxu0 %v1405
    %1425 = vmatmul.f32.gmra.mxu0 %v1085
    %v1426 = vpop.f32.mrf.mxu0
    %v1427 = vadd.f32 0.0, %v1426
    %1428 = vdwg.mxu0
    %v1429 = vadd.f32 %v1403, %v1427
    %v1430 = vld [vmem:[%s10] sm:$0x1]
    %v1432 = vperm.slane %v1430, 0
    %v1434 = vadd.f32 %v1429, %v1432
    %v1435 = vtanh.pop %v1434
    %v1436 = vld [vmem:[%s16] sm:$0xff]
    %v1437 = vld [vmem:[%s16 + $0x8] sm:$0xff]
    %v1438 = vld [vmem:[%s16 + $0x10] sm:$0xff]
    %v1439 = vld [vmem:[%s16 + $0x18] sm:$0xff]
    %v1440 = vld [vmem:[%s17] sm:$0xff]
    %v1441 = vld [vmem:[%s17 + $0x8] sm:$0xff]
    %v1442 = vld [vmem:[%s17 + $0x10] sm:$0xff]
    %v1443 = vld [vmem:[%s17 + $0x18] sm:$0xff]
    %v1444 = vsel %vm1084, %v1077, 0
    %1446 = vmatpush.msra.mxu0 0.0
    %1447 = vmatpush.msra.mxu0 0.0
    %1448 = vmatpush.msra.mxu0 0.0
    %1449 = vmatpush.msra.mxu0 0.0
    %1450 = vmatpush.msra.mxu0 0.0
    %1451 = vmatpush.msra.mxu0 0.0
    %1452 = vmatpush.msra.mxu0 0.0
    %1453 = vmatpush.msra.mxu0 0.0
    %1454 = vmatpush.msra.mxu0 0.0
    %1455 = vmatpush.msra.mxu0 0.0
    %1456 = vmatpush.msra.mxu0 0.0
    %1457 = vmatpush.msra.mxu0 0.0
    %1458 = vmatpush.msra.mxu0 %v1443
    %1459 = vmatpush.msra.mxu0 %v1442
    %1460 = vmatpush.msra.mxu0 %v1441
    %1461 = vmatpush.msra.mxu0 %v1440
    %1462 = vmatmul.f32.gmra.mxu0 %v1444
    %v1463 = vpop.f32.mrf.mxu0
    %v1464 = vadd.f32 0.0, %v1463
    %1465 = vdwg.mxu0
    %v1467 = vsel %vm1084, %v1435, 0
    %1469 = vmatpush.msra.mxu0 0.0
    %1470 = vmatpush.msra.mxu0 0.0
    %1471 = vmatpush.msra.mxu0 0.0
    %1472 = vmatpush.msra.mxu0 0.0
    %1473 = vmatpush.msra.mxu0 0.0
    %1474 = vmatpush.msra.mxu0 0.0
    %1475 = vmatpush.msra.mxu0 0.0
    %1476 = vmatpush.msra.mxu0 0.0
    %1477 = vmatpush.msra.mxu0 0.0
    %1478 = vmatpush.msra.mxu0 0.0
    %1479 = vmatpush.msra.mxu0 0.0
    %1480 = vmatpush.msra.mxu0 0.0
    %1481 = vmatpush.msra.mxu0 %v1439
    %1482 = vmatpush.msra.mxu0 %v1438
    %1483 = vmatpush.msra.mxu0 %v1437
    %1484 = vmatpush.msra.mxu0 %v1436
    %1485 = vmatmul.f32.gmra.mxu0 %v1467
    %v1486 = vpop.f32.mrf.mxu0
    %v1487 = vadd.f32 %v1464, %v1486
    %1488 = vdwg.mxu0
    %v1489 = vld [vmem:[%s18] sm:$0x1]
    %v1491 = vperm.slane %v1489, 0
    %v1493 = vadd.f32 %v1487, %v1491
    %v1494 = vld [vmem:[%s13] sm:$0xff]
    %v1495 = vld [vmem:[%s13 + $0x8] sm:$0xff]
    %v1497 = vsel %vm1218, %v1494, 0
    %v1500 = vsel %vm1218, %v1495, 0
    %v1503 = vsel %vm1040, %v1493, 0
    %1505 = vmatpush.msra.mxu0 0.0
    %1506 = vmatpush.msra.mxu0 0.0
    %1507 = vmatpush.msra.mxu0 0.0
    %1508 = vmatpush.msra.mxu0 0.0
    %1509 = vmatpush.msra.mxu0 0.0
    %1510 = vmatpush.msra.mxu0 0.0
    %1511 = vmatpush.msra.mxu0 0.0
    %1512 = vmatpush.msra.mxu0 0.0
    %1513 = vmatpush.msra.mxu0 0.0
    %1514 = vmatpush.msra.mxu0 0.0
    %1515 = vmatpush.msra.mxu0 0.0
    %1516 = vmatpush.msra.mxu0 0.0
    %1517 = vmatpush.msra.mxu0 0.0
    %1518 = vmatpush.msra.mxu0 0.0
    %1519 = vmatpush.msra.mxu0 0.0
    %1520 = vmatpush.msra.mxu0 %v1503
    %1521 = vmatmul.f32.gmra.mxu0 %v1497
    %v1522 = vpop.f32.mrf.mxu0
    %v1523 = vadd.f32 0.0, %v1522
    %1524 = vmatmul.f32.gmra.mxu0 %v1500
    %v1525 = vpop.f32.mrf.mxu0
    %v1526 = vadd.f32 0.0, %v1525
    %1527 = vdwg.mxu0
    %v1528 = vsel %vm1040, %v1083, 0
    %1530 = vmatpush.msra.mxu0 0.0
    %1531 = vmatpush.msra.mxu0 0.0
    %1532 = vmatpush.msra.mxu0 0.0
    %1533 = vmatpush.msra.mxu0 0.0
    %1534 = vmatpush.msra.mxu0 0.0
    %1535 = vmatpush.msra.mxu0 0.0
    %1536 = vmatpush.msra.mxu0 0.0
    %1537 = vmatpush.msra.mxu0 0.0
    %1538 = vmatpush.msra.mxu0 0.0
    %1539 = vmatpush.msra.mxu0 0.0
    %1540 = vmatpush.msra.mxu0 0.0
    %1541 = vmatpush.msra.mxu0 0.0
    %1542 = vmatpush.msra.mxu0 0.0
    %1543 = vmatpush.msra.mxu0 0.0
    %1544 = vmatpush.msra.mxu0 0.0
    %1545 = vmatpush.msra.mxu0 %v1528
    %1546 = vmatmul.f32.gmra.mxu0 %v1497
    %v1547 = vpop.f32.mrf.mxu0
    %v1548 = vadd.f32 0.0, %v1547
    %1549 = vmatmul.f32.gmra.mxu0 %v1500
    %v1550 = vpop.f32.mrf.mxu0
    %v1551 = vadd.f32 0.0, %v1550
    %1552 = vdwg.mxu0
    %v1553 = vld [vmem:[%s11] sm:$0xff]
    %v1554 = vld [vmem:[%s11 + $0x8] sm:$0xff]
    %v1555 = vld [vmem:[%s15] sm:$0xff]
    %v1556 = vld [vmem:[%s15 + $0x8] sm:$0xff]
    %v1557 = vld [vmem:[%s15 + $0x10] sm:$0xff]
    %v1558 = vld [vmem:[%s15 + $0x18] sm:$0xff]
    %v1560 = vsel %vm1084, %v1553, 0
    %v1563 = vsel %vm1084, %v1554, 0
    %1565 = vmatpush.msra.mxu0 0.0
    %1566 = vmatpush.msra.mxu0 0.0
    %1567 = vmatpush.msra.mxu0 0.0
    %1568 = vmatpush.msra.mxu0 0.0
    %1569 = vmatpush.msra.mxu0 0.0
    %1570 = vmatpush.msra.mxu0 0.0
    %1571 = vmatpush.msra.mxu0 0.0
    %1572 = vmatpush.msra.mxu0 0.0
    %1573 = vmatpush.msra.mxu0 0.0
    %1574 = vmatpush.msra.mxu0 0.0
    %1575 = vmatpush.msra.mxu0 0.0
    %1576 = vmatpush.msra.mxu0 0.0
    %1577 = vmatpush.msra.mxu0 %v1558
    %1578 = vmatpush.msra.mxu0 %v1557
    %1579 = vmatpush.msra.mxu0 %v1556
    %1580 = vmatpush.msra.mxu0 %v1555
    %1581 = vmatmul.f32.gmra.mxu0 %v1560
    %v1582 = vpop.f32.mrf.mxu0
    %v1583 = vadd.f32 %v1523, %v1582
    %1584 = vmatmul.f32.gmra.mxu0 %v1563
    %v1585 = vpop.f32.mrf.mxu0
    %v1586 = vadd.f32 %v1526, %v1585
    %1587 = vdwg.mxu0
    %v1588 = vxor.u32 %v1583, 2147483648
    %v1589 = vxor.u32 %v1586, 2147483648
    %v1590 = vmul.f32 %v1588, 1.442695
    %v1591 = vpow.pop %v1590
    %v1592 = vmul.f32 %v1589, 1.442695
    %v1593 = vpow.pop %v1592
    %v1594 = vadd.f32 %v1591, 1.0
    %v1595 = vadd.f32 %v1593, 1.0
    %v1596 = vrcp.pop %v1594
    %v1597 = vmul.f32 %v1594, %v1596
    %v1598 = vsub.f32 1.0, %v1597
    %v1599 = vmul.f32 %v1596, %v1598
    %v1600 = vadd.f32 %v1596, %v1599
    %vm1601 = vweird.f32 %v1594
    %vm1602 = vweird.f32 %v1596
    %vm1603 = vmor %vm1601, %vm1602
    %v1604 = vsel %vm1603, %v1596, %v1600
    %v1605 = vand.u32 2147483647, %v1594
    %vm1606 = vcmp.eq.f32.partialorder %v1605, 8.507059e+37
    %v1607 = vand.u32 %v1594, 2147483648
    %v1608 = vor.u32 1.1754944e-38, %v1607
    %v1609 = vsel %vm1606, %v1608, %v1604
    %v1610 = vmul.f32 1.0, %v1609
    %v1611 = vrcp.pop %v1595
    %v1612 = vmul.f32 %v1595, %v1611
    %v1613 = vsub.f32 1.0, %v1612
    %v1614 = vmul.f32 %v1611, %v1613
    %v1615 = vadd.f32 %v1611, %v1614
    %vm1616 = vweird.f32 %v1595
    %vm1617 = vweird.f32 %v1611
    %vm1618 = vmor %vm1616, %vm1617
    %v1619 = vsel %vm1618, %v1611, %v1615
    %v1620 = vand.u32 2147483647, %v1595
    %vm1621 = vcmp.eq.f32.partialorder %v1620, 8.507059e+37
    %v1622 = vand.u32 %v1595, 2147483648
    %v1623 = vor.u32 1.1754944e-38, %v1622
    %v1624 = vsel %vm1621, %v1623, %v1619
    %v1625 = vmul.f32 1.0, %v1624
    %v1626 = vtanh.pop %v1583
    %v1627 = vtanh.pop %v1586
    %1630 = vrot.lane.b32.xlu0 %v1548, 32
    %v1631 = vpop.permute.xlu0 %1630
    %1632 = vrot.lane.b32.xlu0 %v1551, 32
    %v1633 = vpop.permute.xlu0 %1632
    %v1636 = vmul.f32 %v1610, %v1631
    %v1637 = vmul.f32 %v1625, %v1633
    %1640 = vrot.lane.b32.xlu0 %v1626, 32
    %v1641 = vpop.permute.xlu0 %1640
    %1642 = vrot.lane.b32.xlu0 %v1627, 32
    %v1643 = vpop.permute.xlu0 %1642
    %v1646 = vmul.f32 %v1610, %v1641
    %v1647 = vmul.f32 %v1625, %v1643
    %1650 = vrot.lane.b32.xlu0 %v1646, 32
    %v1651 = vpop.permute.xlu0 %1650
    %1652 = vrot.lane.b32.xlu0 %v1647, 32
    %v1653 = vpop.permute.xlu0 %1652
    %v1656 = vadd.f32 %v1636, %v1651
    %v1657 = vadd.f32 %v1637, %v1653
    %v1658 = vtanh.pop %v1656
    %v1659 = vtanh.pop %v1657
    %1662 = vrot.lane.b32.xlu0 %v1658, 32
    %v1663 = vpop.permute.xlu0 %1662
    %1664 = vrot.lane.b32.xlu0 %v1659, 32
    %v1665 = vpop.permute.xlu0 %1664
    %v1668 = vmul.f32 %v1610, %v1663
    %v1669 = vmul.f32 %v1625, %v1665
    %v1670 = vld [vmem:[%s19] sm:$0xff]
    %v1671 = vld [vmem:[%s19 + $0x8] sm:$0xff]
    %v1672 = vld [vmem:[%s19 + $0x10] sm:$0xff]
    %v1673 = vld [vmem:[%s19 + $0x18] sm:$0xff]
    %v1674 = vld [vmem:[%s20] sm:$0x1]
    %v1676 = vperm.slane %v1674, 0
    %1680 = vrot.lane.b32.xlu0 %v1668, 64
    %v1681 = vpop.permute.xlu0 %1680
    %1682 = vrot.lane.b32.xlu0 %v1669, 64
    %v1683 = vpop.permute.xlu0 %1682
    %v1684 = vsel %vm1084, %v1681, 0
    %v1686 = vsel %vm1084, %v1683, 0
    %1688 = vmatpush.msra.mxu0 0.0
    %1689 = vmatpush.msra.mxu0 0.0
    %1690 = vmatpush.msra.mxu0 0.0
    %1691 = vmatpush.msra.mxu0 0.0
    %1692 = vmatpush.msra.mxu0 0.0
    %1693 = vmatpush.msra.mxu0 0.0
    %1694 = vmatpush.msra.mxu0 0.0
    %1695 = vmatpush.msra.mxu0 0.0
    %1696 = vmatpush.msra.mxu0 0.0
    %1697 = vmatpush.msra.mxu0 0.0
    %1698 = vmatpush.msra.mxu0 0.0
    %1699 = vmatpush.msra.mxu0 0.0
    %1700 = vmatpush.msra.mxu0 %v1673
    %1701 = vmatpush.msra.mxu0 %v1672
    %1702 = vmatpush.msra.mxu0 %v1671
    %1703 = vmatpush.msra.mxu0 %v1670
    %1704 = vmatmul.f32.gmra.mxu0 %v1684
    %v1705 = vpop.f32.mrf.mxu0
    %v1706 = vadd.f32 %v1676, %v1705
    %1707 = vmatmul.f32.gmra.mxu0 %v1686
    %v1708 = vpop.f32.mrf.mxu0
    %v1709 = vadd.f32 %v1676, %v1708
    %1710 = vdwg.mxu0
    %1711 = vmax.xlane.f32.xlu0 %v1706
    %v1712 = vpop.xlane.xlu0 %1711
    %1713 = vmax.xlane.f32.xlu0 %v1709
    %v1714 = vpop.xlane.xlu0 %1713
    %v1715 = vsub.f32 %v1706, %v1712
    %v1716 = vsub.f32 %v1709, %v1714
    %v1717 = vmul.f32 %v1715, 1.442695
    %v1718 = vpow.pop %v1717
    %v1719 = vmul.f32 %v1716, 1.442695
    %v1720 = vpow.pop %v1719
    %1721 = vadd.xlane.f32.xlu0 %v1718
    %v1722 = vpop.xlane.xlu0 %1721
    %1723 = vadd.xlane.f32.xlu0 %v1720
    %v1724 = vpop.xlane.xlu0 %1723
    %v1725 = vlog2.pop %v1722
    %v1726 = vmul.f32 %v1725, 0.6931472
    %v1727 = vlog2.pop %v1724
    %v1728 = vmul.f32 %v1727, 0.6931472
    %v1729 = vadd.f32 %v1712, %v1726
    %v1730 = vadd.f32 %v1714, %v1728
    %v1731 = vlaneseq
    %v1732 = vand.u32 %v1731, 127
    %v1733 = vld [vmem:[%s12] sm:$0xff]
    %v1734 = vld [vmem:[%s12 + $0x8] sm:$0xff]
    %1735 = vset.pattern.permute.xlu0 0
    %1736 = vperm.xlu0 %1735, %v1733
    %v1737 = vpop.permute.xlu0 %1736
    %1738 = vset.pattern.permute.xlu0 0
    %1739 = vperm.xlu0 %1738, %v1734
    %v1740 = vpop.permute.xlu0 %1739
    %vm1741 = vcmp.eq.s32.totalorder %v1732, %v1737
    %vm1742 = vcmp.eq.s32.totalorder %v1732, %v1740
    %v1743 = vsel %vm1741, %v1706, 0.0
    %v1744 = vsel %vm1742, %v1709, 0.0
    %1745 = vadd.xlane.f32.xlu0 %v1743
    %v1746 = vpop.xlane.xlu0 %1745
    %1747 = vadd.xlane.f32.xlu0 %v1744
    %v1748 = vpop.xlane.xlu0 %1747
    %v1749 = vsub.f32 %v1729, %v1746
    %v1750 = vsub.f32 %v1730, %v1748
    %v1751 = vld [vmem:[%s14] sm:$0xff]
    %v1752 = vld [vmem:[%s14 + $0x8] sm:$0xff]
    %v1753 = vmul.f32 %v1749, %v1751
    %v1754 = vmul.f32 %v1750, %v1752
    %v1755 = vsel %vm1216, %v1753, 0.0
    %v1756 = vsel %vm1216, %v1754, 0.0
    %v1757 = vadd.f32 %v1755, %v1756
    %v1758 = vrot.slane %v1757, 4
    %v1759 = vadd.f32 %v1757, %v1758
    %v1760 = vrot.slane %v1759, 2
    %v1761 = vadd.f32 %v1759, %v1760
    %v1762 = vrot.slane %v1761, 1
    %v1763 = vadd.f32 %v1761, %v1762
    %v1764 = vmul.f32 %v1763, 0.5
    %vm1765 = vcmask 0
    %1766 = vst.msk [vmem:[#allocation2] sm:$0x1] %vm1765, %v1764
    // Predicated region
    $region86: #{seq2seq_forward.1} parent=1 // pred_check
      _
    $region87: #{seq2seq_forward.1} parent=1 // pred_check_branch
      %1768 = sbr.rel (0) target = $region89
    $region88: #{seq2seq_forward.1} parent=1 // pred_region
      %1770 = vsyncadd [#allocation3], 0
      %s1772 = sshll.u32 [#allocation2], 4
      %s1773 = int_to_ptr.vmem [resolvable:$true] %s1772
      %s1774 = sshll.u32 %s21, 4
      %s1775 = int_to_ptr.hbm [resolvable:$true] %s1774
      %1777 = dma.vmem_to_hbm [thread:$0]  %s1773, 16, %s1775, [#allocation3]
    $region89: #{seq2seq_forward.1} parent=1 // pred_fallthru
      _
    // Predicated region
    $region90: #{seq2seq_forward.1} parent=1 // pred_check
      _
    $region91: #{seq2seq_forward.1} parent=1 // pred_check_branch
      %1779 = sbr.rel (0) target = $region93
    $region92: #{seq2seq_forward.1} parent=1 // pred_region
      %1781 = dma.done [#allocation3], 16
    $region93: #{seq2seq_forward.1} parent=1 // pred_fallthru
      _
    %1782 = vsyncpa [#allocation3], 1

</llo_original>
